<compile_context>
chip_gen: v6e
topology: v6e:2x2x1
jax: 0.10.0
libtpu: 0.0.40
codegen_flags: <defaults>
</compile_context>

<pallas_src>
import functools

import jax
import jax.numpy as jnp
from jax.experimental import pallas as pl
from jax.experimental.pallas import tpu as pltpu

EPS = 1e-07
_LANE = 128


def _newton_recip(denom):
    # EUP approximate reciprocal + one Newton refinement (~f32 accuracy) keeps
    # the divide off the VALU critical path.
    inv = pl.reciprocal(denom, approx=True)
    return inv * (2.0 - denom * inv)


def _mhln_folded_kernel(x_ref, gb_ref, m_ref, o_ref, *, eps):
    """Lane-dense path: D < 128, 128 % D == 0 and (S*D) % 128 == 0.

    x_ref : (H, Rb, 128)  -- k = 128//D consecutive length-D rows folded per lane row
    gb_ref: (2, H, 128)   -- gamma / beta, tiled k times along the lane axis
    m_ref : (128, 128)    -- block-diagonal segment-mean matrix (1/D inside a segment)
    """
    heads = x_ref.shape[0]
    gb = gb_ref[...].astype(jnp.float32)
    m = m_ref[...]
    for h in range(heads):
        xh = x_ref[h].astype(jnp.float32)                      # (Rb, 128)
        # One matmul both reduces within each D-wide lane segment and
        # broadcasts the result back to every lane of that segment.
        mean = jnp.dot(xh, m, precision=jax.lax.Precision.HIGHEST,
                       preferred_element_type=jnp.float32)
        ex2 = jnp.dot(xh * xh, m, precision=jax.lax.Precision.HIGHEST,
                      preferred_element_type=jnp.float32)
        var = jnp.maximum(ex2 - mean * mean, 0.0)
        denom = jnp.sqrt(var) + eps                            # eps on std (PyTorch)
        inv = _newton_recip(denom)
        gh = gb[0, h:h + 1, :]                                 # (1, 128)
        bh = gb[1, h:h + 1, :]
        o_ref[h] = ((xh - mean) * inv * gh + bh).astype(o_ref.dtype)


def _mhln_plain_kernel(x_ref, gb_ref, o_ref, *, eps):
    """Generic fallback (D >= 128, or D does not divide 128)."""
    heads = x_ref.shape[0]
    gb = gb_ref[...].astype(jnp.float32)                       # (2, H, D)
    for h in range(heads):
        xh = x_ref[h].astype(jnp.float32)                      # (Sb, D)
        mean = jnp.mean(xh, axis=-1, keepdims=True)
        ex2 = jnp.mean(xh * xh, axis=-1, keepdims=True)
        var = jnp.maximum(ex2 - mean * mean, 0.0)
        denom = jnp.sqrt(var) + eps
        inv = _newton_recip(denom)
        gh = gb[0, h:h + 1, :]                                 # (1, D)
        bh = gb[1, h:h + 1, :]
        o_ref[h] = ((xh - mean) * inv * gh + bh).astype(o_ref.dtype)


def _pick_row_block(total_rows, heads, lane, itemsize, target_bytes=2 * 1024 * 1024):
    """Rows per block: ~target_bytes payload, multiple of 8 (or the full extent)."""
    rows = target_bytes // max(1, heads * lane * itemsize)
    rows = max(8, (rows // 8) * 8)
    if rows >= total_rows:
        return int(total_rows)
    return int(rows)


def multihead_layer_norm(x, g, b, eps=EPS):
    """x: (B, H, S, D); g, b: (H, 1, D) (PyTorch parameter shape)."""
    B, H, S, D = x.shape
    g2 = g.reshape(H, D)
    b2 = b.reshape(H, D)
    itemsize = jnp.dtype(x.dtype).itemsize

    compiler_params = pltpu.CompilerParams(
        dimension_semantics=("parallel", "parallel"),
        vmem_limit_bytes=32 * 1024 * 1024,   # <= scoped/physical VMEM on v5e/v6e/v7x
    )

    lane_dense = (D < _LANE) and (_LANE % D == 0) and ((S * D) % _LANE == 0)
    if lane_dense:
        k = _LANE // D
        R = (S * D) // _LANE                         # folded rows per (b, h)
        xr = x.reshape(B, H, R, _LANE)               # free contiguous reshape
        # gamma/beta tiled across the k folded segments, stacked into one stream.
        gb = jnp.stack([jnp.tile(g2, (1, k)), jnp.tile(b2, (1, k))], axis=0)
        seg = jnp.arange(_LANE) // D
        m = (seg[:, None] == seg[None, :]).astype(jnp.float32) / float(D)

        rb = _pick_row_block(R, H, _LANE, itemsize)
        grid = (B, pl.cdiv(R, rb))
        kernel = functools.partial(_mhln_folded_kernel, eps=eps)
        out = pl.pallas_call(
            kernel,
            out_shape=jax.ShapeDtypeStruct((B, H, R, _LANE), x.dtype),
            grid_spec=pltpu.PrefetchScalarGridSpec(
                num_scalar_prefetch=0,
                grid=grid,
                in_specs=[
                    pl.BlockSpec((None, H, rb, _LANE),
                                 lambda bi, ri: (bi, 0, ri, 0)),
                    pl.BlockSpec((2, H, _LANE), lambda bi, ri: (0, 0, 0)),
                    pl.BlockSpec((_LANE, _LANE), lambda bi, ri: (0, 0)),
                ],
                out_specs=pl.BlockSpec((None, H, rb, _LANE),
                                       lambda bi, ri: (bi, 0, ri, 0)),
            ),
            compiler_params=compiler_params,
        )(xr, gb, m)
        return out.reshape(B, H, S, D)

    # Generic fallback: reduction stays on the D lane axis; still fuses all heads
    # per block and passes g/b untiled (single constant-index DMA).
    gb = jnp.stack([g2, b2], axis=0)                 # (2, H, D)
    sb = _pick_row_block(S, H, D, itemsize)
    grid = (B, pl.cdiv(S, sb))
    kernel = functools.partial(_mhln_plain_kernel, eps=eps)
    return pl.pallas_call(
        kernel,
        out_shape=jax.ShapeDtypeStruct((B, H, S, D), x.dtype),
        grid_spec=pltpu.PrefetchScalarGridSpec(
            num_scalar_prefetch=0,
            grid=grid,
            in_specs=[
                pl.BlockSpec((None, H, sb, D), lambda bi, si: (bi, 0, si, 0)),
                pl.BlockSpec((2, H, D), lambda bi, si: (0, 0, 0)),
            ],
            out_specs=pl.BlockSpec((None, H, sb, D), lambda bi, si: (bi, 0, si, 0)),
        ),
        compiler_params=compiler_params,
    )(x, gb)


def _reference(x, g, b, eps=EPS):
    H, _, D = g.shape
    mean = jnp.mean(x, axis=-1, keepdims=True)
    std = jnp.sqrt(jnp.var(x, axis=-1, keepdims=True))
    return (x - mean) / (std + eps) * g.reshape(1, H, 1, D) + b.reshape(1, H, 1, D)


if __name__ == "__main__":
    key = jax.random.PRNGKey(0)
    kx, kg, kb, kx2, kg2, kb2 = jax.random.split(key, 6)
    mhln = jax.jit(multihead_layer_norm)

    # Lane-dense path: D = 32 divides 128 -> 4 rows folded per 128-lane vreg row.
    B, H, S, D = 2, 2, 8, 32
    x = jax.random.normal(kx, (B, H, S, D), dtype=jnp.float32)
    g = jax.random.normal(kg, (H, 1, D), dtype=jnp.float32)
    b = jax.random.normal(kb, (H, 1, D), dtype=jnp.float32)
    out = jax.block_until_ready(mhln(x, g, b))
    ref = _reference(x, g, b)
    # tolerance 1e-4: approx reciprocal + Newton step is ~1e-6 relative accuracy.
    assert out.shape == ref.shape
    assert jnp.allclose(out, ref, atol=1e-4, rtol=1e-4), float(
        jnp.max(jnp.abs(out - ref)))

    # Generic fallback path: D = 48 does not divide 128.
    B2, H2, S2, D2 = 2, 2, 8, 48
    x_b = jax.random.normal(kx2, (B2, H2, S2, D2), dtype=jnp.float32)
    g_b = jax.random.normal(kg2, (H2, 1, D2), dtype=jnp.float32)
    b_b = jax.random.normal(kb2, (H2, 1, D2), dtype=jnp.float32)
    out2 = jax.block_until_ready(mhln(x_b, g_b, b_b))
    ref2 = _reference(x_b, g_b, b_b)
    assert jnp.allclose(out2, ref2, atol=1e-4, rtol=1e-4), float(
        jnp.max(jnp.abs(out2 - ref2)))

    print("KERNEL_OK")
</pallas_src>

<mosaic_0001>
module attributes {stable_mosaic.version = 11 : i64} {
  func.func @_mhln_folded_kernel(%arg0: i32, %arg1: i32, %arg2: memref<1x2x2x128xf32, #tpu.memory_space<vmem>>, %arg3: memref<2x2x128xf32, #tpu.memory_space<vmem>>, %arg4: memref<128x128xf32, #tpu.memory_space<vmem>>, %arg5: memref<1x2x2x128xf32, #tpu.memory_space<vmem>>) attributes {dimension_semantics = [#tpu.dimension_semantics<parallel>, #tpu.dimension_semantics<parallel>], iteration_bounds = array<i64: 2, 1>, scalar_prefetch = 0 : i64, scratch_operands = 0 : i64, tpu.core_type = #tpu.core_type<tc>, window_params = [{transform_indices = @transform_0, window_bounds = array<i64: 1, 2, 2, 128>}, {pipeline_mode = #tpu.pipeline_mode<synchronous>, transform_indices = @transform_1, window_bounds = array<i64: 2, 2, 128>}, {pipeline_mode = #tpu.pipeline_mode<synchronous>, transform_indices = @transform_2, window_bounds = array<i64: 128, 128>}, {transform_indices = @transform_3, window_bounds = array<i64: 1, 2, 2, 128>}]} {
    %c0 = arith.constant 0 : index
    %c0_0 = arith.constant 0 : index
    %c0_1 = arith.constant 0 : index
    %0 = vector.load %arg3[%c0, %c0_0, %c0_1] : memref<2x2x128xf32, #tpu.memory_space<vmem>>, vector<2x2x128xf32>
    %c0_2 = arith.constant 0 : index
    %c0_3 = arith.constant 0 : index
    %1 = vector.load %arg4[%c0_2, %c0_3] : memref<128x128xf32, #tpu.memory_space<vmem>>, vector<128x128xf32>
    %c0_4 = arith.constant 0 : index
    %c0_5 = arith.constant 0 : index
    %c0_6 = arith.constant 0 : index
    %c0_7 = arith.constant 0 : index
    %2 = vector.load %arg2[%c0_4, %c0_5, %c0_6, %c0_7] : memref<1x2x2x128xf32, #tpu.memory_space<vmem>>, vector<1x1x2x128xf32>
    %3 = vector.shape_cast %2 : vector<1x1x2x128xf32> to vector<2x128xf32>
    %cst = arith.constant dense<0.000000e+00> : vector<2x128xf32>
    %4 = tpu.matmul %3, %1, %cst {dimension_numbers = #tpu.dot_dimension_numbers<[1], [0], [0], [1], [0, 0, 1, 1], [], []>, precision = #tpu.contract_precision<fp32>} : vector<2x128xf32>, vector<128x128xf32>, vector<2x128xf32> -> vector<2x128xf32>
    %5 = arith.mulf %3, %3 : vector<2x128xf32>
    %cst_8 = arith.constant dense<0.000000e+00> : vector<2x128xf32>
    %6 = tpu.matmul %5, %1, %cst_8 {dimension_numbers = #tpu.dot_dimension_numbers<[1], [0], [0], [1], [0, 0, 1, 1], [], []>, precision = #tpu.contract_precision<fp32>} : vector<2x128xf32>, vector<128x128xf32>, vector<2x128xf32> -> vector<2x128xf32>
    %7 = arith.mulf %4, %4 : vector<2x128xf32>
    %8 = arith.subf %6, %7 : vector<2x128xf32>
    %cst_9 = arith.constant 0.000000e+00 : f32
    %9 = vector.broadcast %cst_9 : f32 to vector<2x128xf32>
    %10 = arith.maximumf %8, %9 : vector<2x128xf32>
    %11 = math.sqrt %10 : vector<2x128xf32>
    %cst_10 = arith.constant 1.000000e-07 : f32
    %12 = vector.broadcast %cst_10 : f32 to vector<2x128xf32>
    %13 = arith.addf %11, %12 : vector<2x128xf32>
    %14 = tpu.reciprocal %13 {approx = true} : vector<2x128xf32> -> vector<2x128xf32>
    %15 = arith.mulf %13, %14 : vector<2x128xf32>
    %cst_11 = arith.constant 2.000000e+00 : f32
    %16 = vector.broadcast %cst_11 : f32 to vector<2x128xf32>
    %17 = arith.subf %16, %15 : vector<2x128xf32>
    %18 = arith.mulf %14, %17 : vector<2x128xf32>
    %19 = vector.extract_strided_slice %0 {offsets = [0, 0, 0], sizes = [1, 1, 128], strides = [1, 1, 1]} : vector<2x2x128xf32> to vector<1x1x128xf32>
    %20 = vector.shape_cast %19 : vector<1x1x128xf32> to vector<1x128xf32>
    %21 = vector.extract_strided_slice %0 {offsets = [1, 0, 0], sizes = [1, 1, 128], strides = [1, 1, 1]} : vector<2x2x128xf32> to vector<1x1x128xf32>
    %22 = vector.shape_cast %21 : vector<1x1x128xf32> to vector<1x128xf32>
    %23 = arith.subf %3, %4 : vector<2x128xf32>
    %24 = arith.mulf %23, %18 : vector<2x128xf32>
    %25 = vector.broadcast %20 : vector<1x128xf32> to vector<2x128xf32>
    %26 = arith.mulf %24, %25 : vector<2x128xf32>
    %27 = vector.broadcast %22 : vector<1x128xf32> to vector<2x128xf32>
    %28 = arith.addf %26, %27 : vector<2x128xf32>
    %c0_12 = arith.constant 0 : index
    %c0_13 = arith.constant 0 : index
    %c0_14 = arith.constant 0 : index
    %c0_15 = arith.constant 0 : index
    %29 = vector.load %arg5[%c0_12, %c0_13, %c0_14, %c0_15] : memref<1x2x2x128xf32, #tpu.memory_space<vmem>>, vector<1x1x2x128xf32>
    %30 = vector.shape_cast %29 : vector<1x1x2x128xf32> to vector<2x128xf32>
    %31 = vector.shape_cast %28 : vector<2x128xf32> to vector<1x1x2x128xf32>
    tpu.vector_store %arg5[%c0_12, %c0_13, %c0_14, %c0_15], %31 {strides = array<i32>} : memref<1x2x2x128xf32, #tpu.memory_space<vmem>>, vector<1x1x2x128xf32>,
    %c0_16 = arith.constant 0 : index
    %c1 = arith.constant 1 : index
    %c0_17 = arith.constant 0 : index
    %c0_18 = arith.constant 0 : index
    %32 = vector.load %arg2[%c0_16, %c1, %c0_17, %c0_18] : memref<1x2x2x128xf32, #tpu.memory_space<vmem>>, vector<1x1x2x128xf32>
    %33 = vector.shape_cast %32 : vector<1x1x2x128xf32> to vector<2x128xf32>
    %cst_19 = arith.constant dense<0.000000e+00> : vector<2x128xf32>
    %34 = tpu.matmul %33, %1, %cst_19 {dimension_numbers = #tpu.dot_dimension_numbers<[1], [0], [0], [1], [0, 0, 1, 1], [], []>, precision = #tpu.contract_precision<fp32>} : vector<2x128xf32>, vector<128x128xf32>, vector<2x128xf32> -> vector<2x128xf32>
    %35 = arith.mulf %33, %33 : vector<2x128xf32>
    %cst_20 = arith.constant dense<0.000000e+00> : vector<2x128xf32>
    %36 = tpu.matmul %35, %1, %cst_20 {dimension_numbers = #tpu.dot_dimension_numbers<[1], [0], [0], [1], [0, 0, 1, 1], [], []>, precision = #tpu.contract_precision<fp32>} : vector<2x128xf32>, vector<128x128xf32>, vector<2x128xf32> -> vector<2x128xf32>
    %37 = arith.mulf %34, %34 : vector<2x128xf32>
    %38 = arith.subf %36, %37 : vector<2x128xf32>
    %cst_21 = arith.constant 0.000000e+00 : f32
    %39 = vector.broadcast %cst_21 : f32 to vector<2x128xf32>
    %40 = arith.maximumf %38, %39 : vector<2x128xf32>
    %41 = math.sqrt %40 : vector<2x128xf32>
    %cst_22 = arith.constant 1.000000e-07 : f32
    %42 = vector.broadcast %cst_22 : f32 to vector<2x128xf32>
    %43 = arith.addf %41, %42 : vector<2x128xf32>
    %44 = tpu.reciprocal %43 {approx = true} : vector<2x128xf32> -> vector<2x128xf32>
    %45 = arith.mulf %43, %44 : vector<2x128xf32>
    %cst_23 = arith.constant 2.000000e+00 : f32
    %46 = vector.broadcast %cst_23 : f32 to vector<2x128xf32>
    %47 = arith.subf %46, %45 : vector<2x128xf32>
    %48 = arith.mulf %44, %47 : vector<2x128xf32>
    %49 = vector.extract_strided_slice %0 {offsets = [0, 1, 0], sizes = [1, 1, 128], strides = [1, 1, 1]} : vector<2x2x128xf32> to vector<1x1x128xf32>
    %50 = vector.shape_cast %49 : vector<1x1x128xf32> to vector<1x128xf32>
    %51 = vector.extract_strided_slice %0 {offsets = [1, 1, 0], sizes = [1, 1, 128], strides = [1, 1, 1]} : vector<2x2x128xf32> to vector<1x1x128xf32>
    %52 = vector.shape_cast %51 : vector<1x1x128xf32> to vector<1x128xf32>
    %53 = arith.subf %33, %34 : vector<2x128xf32>
    %54 = arith.mulf %53, %48 : vector<2x128xf32>
    %55 = vector.broadcast %50 : vector<1x128xf32> to vector<2x128xf32>
    %56 = arith.mulf %54, %55 : vector<2x128xf32>
    %57 = vector.broadcast %52 : vector<1x128xf32> to vector<2x128xf32>
    %58 = arith.addf %56, %57 : vector<2x128xf32>
    %c0_24 = arith.constant 0 : index
    %c1_25 = arith.constant 1 : index
    %c0_26 = arith.constant 0 : index
    %c0_27 = arith.constant 0 : index
    %59 = vector.load %arg5[%c0_24, %c1_25, %c0_26, %c0_27] : memref<1x2x2x128xf32, #tpu.memory_space<vmem>>, vector<1x1x2x128xf32>
    %60 = vector.shape_cast %59 : vector<1x1x2x128xf32> to vector<2x128xf32>
    %61 = vector.shape_cast %58 : vector<2x128xf32> to vector<1x1x2x128xf32>
    tpu.vector_store %arg5[%c0_24, %c1_25, %c0_26, %c0_27], %61 {strides = array<i32>} : memref<1x2x2x128xf32, #tpu.memory_space<vmem>>, vector<1x1x2x128xf32>,
    return
  }
  func.func @transform_0(%arg0: i32, %arg1: i32) -> (i32, i32, i32, i32) {
    %c0_i32 = arith.constant 0 : i32
    %c0_i32_0 = arith.constant 0 : i32
    %c0_i32_1 = arith.constant 0 : i32
    return %arg0, %c0_i32, %arg1, %c0_i32_0 : i32, i32, i32, i32
  }
  func.func @transform_1(%arg0: i32, %arg1: i32) -> (i32, i32, i32) {
    %c0_i32 = arith.constant 0 : i32
    %c0_i32_0 = arith.constant 0 : i32
    %c0_i32_1 = arith.constant 0 : i32
    %c0_i32_2 = arith.constant 0 : i32
    return %c0_i32, %c0_i32_0, %c0_i32_1 : i32, i32, i32
  }
  func.func @transform_2(%arg0: i32, %arg1: i32) -> (i32, i32) {
    %c0_i32 = arith.constant 0 : i32
    %c0_i32_0 = arith.constant 0 : i32
    %c0_i32_1 = arith.constant 0 : i32
    return %c0_i32, %c0_i32_0 : i32, i32
  }
  func.func @transform_3(%arg0: i32, %arg1: i32) -> (i32, i32, i32, i32) {
    %c0_i32 = arith.constant 0 : i32
    %c0_i32_0 = arith.constant 0 : i32
    %c0_i32_1 = arith.constant 0 : i32
    return %arg0, %c0_i32, %arg1, %c0_i32_0 : i32, i32, i32, i32
  }
}

</mosaic_0001>

<llo_original>
// kernel: multihead_layer_norm.1
$region0: #{multihead_layer_norm.1}
  #allocation0 [shape = 'u32[]', space=smem, size = 0x4, offset = 0x4, fixed_abs, tag = 'smem constant byte address 0x4 - core index']
  #allocation1 [shape = 'u32[144,128]{1,0:T(1,128)}', space=vmem, size = 0x12000, scoped, tag = 'internal scratch']
  %s0 = inlined_call_operand.vmem [shape: f32[2,2,2,128], index: 0, kind: input, shape index: {}]
  %s1 = inlined_call_operand.vmem [shape: f32[2,2,128], index: 1, kind: input, shape index: {}]
  %s2 = inlined_call_operand.vmem [shape: f32[128,128], index: 2, kind: input, shape index: {}]
  %s3 = inlined_call_operand.vmem [shape: f32[2,2,2,128], index: 3, kind: output, shape index: {}]
  %s4 = sld [smem:[#allocation0]]
  $region45: #{multihead_layer_norm.1} parent=0
    _
  %s6 = ssub.s32 1, %s4
  %s7 = scalar_select 0, %s6, %s4
  loop: start=0, step=1, limit=4
  $region2: #{multihead_layer_norm.1} parent=0 // loop_pre_header
    _
  $region3: #{multihead_layer_norm.1} parent=0 // loop_header
    %s9 = sphi 0, %s13
    %p10 = scmp.ge.s32.totalorder %s9, 4
    %s16 = sphi 0, %s28
    %s17 = sphi 0, %s24
    %s18 = sphi 0, %s16
    %s19 = sphi 0, %s17
    %s20 = sphi 0, %s18
    %s21 = sphi 0, %s19
    %s33 = sphi 0, %s35
    %s36 = sphi 0, %s33
    %s37 = sphi 0, %s36
    %s53 = sphi 0, %s37
    %s57 = sphi 0, %s57
    %s59 = sphi 0, %s57
    %s60 = sphi 0, %s59
    %s74 = sphi 0, %s60
    %s78 = sphi 0, %s78
    %s80 = sphi 0, %s78
    %s81 = sphi 0, %s80
    %s95 = sphi 0, %s81
    %s103 = sphi 0, %s105
    %s106 = sphi 0, %s103
    %s107 = sphi 0, %s106
    %s123 = sphi 0, %s107
  $region4: #{multihead_layer_norm.1} parent=0 // loop_header_branch
    %12 = sbr.rel (%p10) target = $region8
  $region5: #{multihead_layer_norm.1} parent=0 // loop_body
    %s14 = ssub.s32 %s9, 1
    %s15 = ssub.s32 %s9, 2
    %s22 = sadd.s32 1, %s17
    %p23 = scmp.ge.s32.totalorder %s22, 1
    %s24 = scalar_select %p23, 0, %s22
    %s25 = sadd.s32 1, %s16
    %s26 = scalar_select %p23, %s25, %s16
    %p27 = scmp.ge.s32.totalorder %s26, 2
    %s28 = scalar_select %p27, 0, %s26
    %s29 = ssub.s32 %s16, %s28
    %s30 = ssub.s32 %s17, %s24
    %s31 = sor.u32 %s29, %s30
    %p32 = scmp.eq.s32.totalorder %s31, 0
    %s34 = sadd.s32 %s33, 1
    %s35 = scalar_select %p32, %s33, %s34
    %p38 = pneg %p32
    %p39 = scmp.eq.s32.totalorder %s9, 1
    %p40 = por %p38, %p39
    %p41 = scmp.ne.s32.totalorder %s33, %s36
    %p42 = scmp.eq.s32.totalorder %s9, 0
    %p43 = por %p41, %p42
    %p44 = scmp.ne.s32.totalorder %s33, %s36
    %p45 = scmp.eq.s32.totalorder %s14, 1
    %p46 = por %p44, %p45
    %p47 = scmp.ne.s32.totalorder %s36, %s37
    %p48 = scmp.eq.s32.totalorder %s14, 0
    %p49 = por %p47, %p48
    %p50 = scmp.ne.s32.totalorder %s36, %s37
    %p51 = scmp.eq.s32.totalorder %s15, 1
    %p52 = por %p50, %p51
    %p54 = scmp.ne.s32.totalorder %s37, %s53
    %p55 = scmp.eq.s32.totalorder %s15, 0
    %p56 = por %p54, %p55
    %s58 = sadd.s32 %s57, 1
    %p61 = scmp.eq.s32.totalorder %s9, 1
    %p62 = scmp.ne.s32.totalorder %s57, %s59
    %p63 = scmp.eq.s32.totalorder %s9, 0
    %p64 = por %p62, %p63
    %p65 = scmp.ne.s32.totalorder %s57, %s59
    %p66 = scmp.eq.s32.totalorder %s14, 1
    %p67 = por %p65, %p66
    %p68 = scmp.ne.s32.totalorder %s59, %s60
    %p69 = scmp.eq.s32.totalorder %s14, 0
    %p70 = por %p68, %p69
    %p71 = scmp.ne.s32.totalorder %s59, %s60
    %p72 = scmp.eq.s32.totalorder %s15, 1
    %p73 = por %p71, %p72
    %p75 = scmp.ne.s32.totalorder %s60, %s74
    %p76 = scmp.eq.s32.totalorder %s15, 0
    %p77 = por %p75, %p76
    %s79 = sadd.s32 %s78, 1
    %p82 = scmp.eq.s32.totalorder %s9, 1
    %p83 = scmp.ne.s32.totalorder %s78, %s80
    %p84 = scmp.eq.s32.totalorder %s9, 0
    %p85 = por %p83, %p84
    %p86 = scmp.ne.s32.totalorder %s78, %s80
    %p87 = scmp.eq.s32.totalorder %s14, 1
    %p88 = por %p86, %p87
    %p89 = scmp.ne.s32.totalorder %s80, %s81
    %p90 = scmp.eq.s32.totalorder %s14, 0
    %p91 = por %p89, %p90
    %p92 = scmp.ne.s32.totalorder %s80, %s81
    %p93 = scmp.eq.s32.totalorder %s15, 1
    %p94 = por %p92, %p93
    %p96 = scmp.ne.s32.totalorder %s81, %s95
    %p97 = scmp.eq.s32.totalorder %s15, 0
    %p98 = por %p96, %p97
    %s99 = ssub.s32 %s16, %s28
    %s100 = ssub.s32 %s17, %s24
    %s101 = sor.u32 %s99, %s100
    %p102 = scmp.eq.s32.totalorder %s101, 0
    %s104 = sadd.s32 %s103, 1
    %s105 = scalar_select %p102, %s103, %s104
    %p108 = pneg %p102
    %p109 = scmp.eq.s32.totalorder %s9, 1
    %p110 = por %p108, %p109
    %p111 = scmp.ne.s32.totalorder %s103, %s106
    %p112 = scmp.eq.s32.totalorder %s9, 0
    %p113 = por %p111, %p112
    %p114 = scmp.ne.s32.totalorder %s103, %s106
    %p115 = scmp.eq.s32.totalorder %s14, 1
    %p116 = por %p114, %p115
    %p117 = scmp.ne.s32.totalorder %s106, %s107
    %p118 = scmp.eq.s32.totalorder %s14, 0
    %p119 = por %p117, %p118
    %p120 = scmp.ne.s32.totalorder %s106, %s107
    %p121 = scmp.eq.s32.totalorder %s15, 1
    %p122 = por %p120, %p121
    %p124 = scmp.ne.s32.totalorder %s107, %s123
    %p125 = scmp.eq.s32.totalorder %s15, 0
    %p126 = por %p124, %p125
    %p127 = scmp.le.s32.totalorder 1, %s9
    %p128 = scmp.lt.s32.totalorder %s9, 3
    %p129 = pnand %p127, %p128
    %p130 = pneg %p129
    // Predicated region
    $region9: #{multihead_layer_norm.1} parent=5 // pred_check
      _
    $region10: #{multihead_layer_norm.1} parent=5 // pred_check_branch
      %132 = sbr.rel (%p129) target = $region12
    $region11: #{multihead_layer_norm.1} parent=5 // pred_region
      %s133 = ssub.s32 %s9, 1
      // Predicated region
      $region13: #{multihead_layer_norm.1} parent=11 // pred_check
        %p134 = pneg %p70
      $region14: #{multihead_layer_norm.1} parent=11 // pred_check_branch
        %136 = sbr.rel (%p134) target = $region16
      $region15: #{multihead_layer_norm.1} parent=11 // pred_region
        _
      $region16: #{multihead_layer_norm.1} parent=11 // pred_fallthru
        _
      // Predicated region
      $region17: #{multihead_layer_norm.1} parent=11 // pred_check
        %p137 = pneg %p91
      $region18: #{multihead_layer_norm.1} parent=11 // pred_check_branch
        %139 = sbr.rel (%p137) target = $region20
      $region19: #{multihead_layer_norm.1} parent=11 // pred_region
        _
      $region20: #{multihead_layer_norm.1} parent=11 // pred_fallthru
        _
    $region12: #{multihead_layer_norm.1} parent=5 // pred_fallthru
      _
    %p140 = scmp.lt.s32.totalorder %s9, 2
    // Predicated region
    $region21: #{multihead_layer_norm.1} parent=5 // pred_check
      %p141 = pneg %p140
    $region22: #{multihead_layer_norm.1} parent=5 // pred_check_branch
      %143 = sbr.rel (%p141) target = $region24
    $region23: #{multihead_layer_norm.1} parent=5 // pred_region
      // Predicated region
      $region25: #{multihead_layer_norm.1} parent=23 // pred_check
        %p144 = pneg %p43
      $region26: #{multihead_layer_norm.1} parent=23 // pred_check_branch
        %146 = sbr.rel (%p144) target = $region28
      $region27: #{multihead_layer_norm.1} parent=23 // pred_region
        %p147 = scmp.lt.s32.totalorder %s16, 1
        %s148 = scalar_select %p147, %s16, 1
        %p149 = scmp.lt.s32.totalorder %s17, 0
        %s150 = scalar_select %p149, %s17, 0
        %s151 = smul.addr %s148, 2
        %s152 = sadd.s32 %s150, %s151
        %s153 = smul.addr %s152, 2
        %s154 = scalar_lea.vmem %s0, %s153
      $region28: #{multihead_layer_norm.1} parent=23 // pred_fallthru
        _
    $region24: #{multihead_layer_norm.1} parent=5 // pred_fallthru
      _
    %p155 = scmp.le.s32.totalorder 1, %s9
    %p156 = scmp.lt.s32.totalorder %s9, 3
    %p157 = pnand %p155, %p156
    %p158 = pneg %p157
    // Predicated region
    $region29: #{multihead_layer_norm.1} parent=5 // pred_check
      _
    $region30: #{multihead_layer_norm.1} parent=5 // pred_check_branch
      %160 = sbr.rel (%p157) target = $region32
    $region31: #{multihead_layer_norm.1} parent=5 // pred_region
      %s161 = ssub.s32 %s9, 1
      %p162 = scmp.lt.s32.totalorder %s18, 1
      %s163 = scalar_select %p162, %s18, 1
      %p164 = scmp.lt.s32.totalorder %s19, 0
      %s165 = scalar_select %p164, %s19, 0
      %s166 = smul.addr %s163, 2
      %s167 = sadd.s32 %s165, %s166
      %s168 = smul.addr %s167, 2
      %s169 = scalar_lea.vmem %s0, %s168
      %p170 = pneg %p49
      %p171 = pneg %p46
      %p172 = pneg %p70
      %p173 = pneg %p67
      %p174 = pneg %p91
      %p175 = pneg %p88
      %p176 = pneg %p119
      %p177 = pneg %p116
      %p178 = scmp.lt.s32.totalorder %s18, 1
      %s179 = scalar_select %p178, %s18, 1
      %p180 = scmp.lt.s32.totalorder %s19, 0
      %s181 = scalar_select %p180, %s19, 0
      %s182 = smul.addr %s179, 2
      %s183 = sadd.s32 %s181, %s182
      %s184 = smul.addr %s183, 2
      %s185 = scalar_lea.vmem %s3, %s184
      %p186 = scmp.lt.s32.totalorder %s18, 1
      %s187 = scalar_select %p186, %s18, 1
      %p188 = scmp.lt.s32.totalorder %s19, 0
      %s189 = scalar_select %p188, %s19, 0
      %s190 = smul.addr %s187, 2
      %s191 = sadd.s32 %s189, %s190
      %s192 = smul.addr %s191, 2
      %s193 = scalar_lea.vmem %s0, %s192
      %p194 = scmp.lt.s32.totalorder %s18, 1
      %s195 = scalar_select %p194, %s18, 1
      %p196 = scmp.lt.s32.totalorder %s19, 0
      %s197 = scalar_select %p196, %s19, 0
      %s198 = smul.addr %s195, 2
      %s199 = sadd.s32 %s197, %s198
      %s200 = smul.addr %s199, 2
      %s201 = scalar_lea.vmem %s3, %s200
      %v202 = vld [vmem:[%s1] sm:$0x3]
      %v203 = vld [vmem:[%s1 + $0x2] sm:$0x3]
      %v204 = vld [vmem:[%s2] sm:$0xff]
      %v205 = vld [vmem:[%s2 + $0x8] sm:$0xff]
      %v206 = vld [vmem:[%s2 + $0x10] sm:$0xff]
      %v207 = vld [vmem:[%s2 + $0x18] sm:$0xff]
      %v208 = vld [vmem:[%s2 + $0x20] sm:$0xff]
      %v209 = vld [vmem:[%s2 + $0x28] sm:$0xff]
      %v210 = vld [vmem:[%s2 + $0x30] sm:$0xff]
      %v211 = vld [vmem:[%s2 + $0x38] sm:$0xff]
      %v212 = vld [vmem:[%s2 + $0x40] sm:$0xff]
      %v213 = vld [vmem:[%s2 + $0x48] sm:$0xff]
      %v214 = vld [vmem:[%s2 + $0x50] sm:$0xff]
      %v215 = vld [vmem:[%s2 + $0x58] sm:$0xff]
      %v216 = vld [vmem:[%s2 + $0x60] sm:$0xff]
      %v217 = vld [vmem:[%s2 + $0x68] sm:$0xff]
      %v218 = vld [vmem:[%s2 + $0x70] sm:$0xff]
      %v219 = vld [vmem:[%s2 + $0x78] sm:$0xff]
      %v220 = vld [vmem:[%s193] sm:$0x3]
      %221 = vmatprep.subr.mxu0 0.0
      %v222 = vand.u32 %v219, 4294901760
      %223 = vmatpush1.msra.mxu0 %v222
      %224 = vmatprep.subr.mxu0 0.0
      %v225 = vand.u32 %v218, 4294901760
      %226 = vmatpush1.msra.mxu0 %v225
      %227 = vmatprep.subr.mxu0 0.0
      %v228 = vand.u32 %v217, 4294901760
      %229 = vmatpush1.msra.mxu0 %v228
      %230 = vmatprep.subr.mxu0 0.0
      %v231 = vand.u32 %v216, 4294901760
      %232 = vmatpush1.msra.mxu0 %v231
      %233 = vmatprep.subr.mxu0 0.0
      %v234 = vand.u32 %v215, 4294901760
      %235 = vmatpush1.msra.mxu0 %v234
      %236 = vmatprep.subr.mxu0 0.0
      %v237 = vand.u32 %v214, 4294901760
      %238 = vmatpush1.msra.mxu0 %v237
      %239 = vmatprep.subr.mxu0 0.0
      %v240 = vand.u32 %v213, 4294901760
      %241 = vmatpush1.msra.mxu0 %v240
      %242 = vmatprep.subr.mxu0 0.0
      %v243 = vand.u32 %v212, 4294901760
      %244 = vmatpush1.msra.mxu0 %v243
      %245 = vmatprep.subr.mxu0 0.0
      %v246 = vand.u32 %v211, 4294901760
      %247 = vmatpush1.msra.mxu0 %v246
      %248 = vmatprep.subr.mxu0 0.0
      %v249 = vand.u32 %v210, 4294901760
      %250 = vmatpush1.msra.mxu0 %v249
      %251 = vmatprep.subr.mxu0 0.0
      %v252 = vand.u32 %v209, 4294901760
      %253 = vmatpush1.msra.mxu0 %v252
      %254 = vmatprep.subr.mxu0 0.0
      %v255 = vand.u32 %v208, 4294901760
      %256 = vmatpush1.msra.mxu0 %v255
      %257 = vmatprep.subr.mxu0 0.0
      %v258 = vand.u32 %v207, 4294901760
      %259 = vmatpush1.msra.mxu0 %v258
      %260 = vmatprep.subr.mxu0 0.0
      %v261 = vand.u32 %v206, 4294901760
      %262 = vmatpush1.msra.mxu0 %v261
      %263 = vmatprep.subr.mxu0 0.0
      %v264 = vand.u32 %v205, 4294901760
      %265 = vmatpush1.msra.mxu0 %v264
      %266 = vmatprep.subr.mxu0 0.0
      %v267 = vand.u32 %v204, 4294901760
      %268 = vmatpush1.msra.mxu0 %v267
      %269 = vmatprep.subr.mxu0 0.0
      %270 = vmatpush2.msra.mxu0 0.0
      %271 = vmatprep.subr.mxu0 0.0
      %272 = vmatpush2.msra.mxu0 0.0
      %273 = vmatprep.subr.mxu0 0.0
      %274 = vmatpush2.msra.mxu0 0.0
      %275 = vmatprep.subr.mxu0 0.0
      %276 = vmatpush2.msra.mxu0 0.0
      %277 = vmatprep.subr.mxu0 0.0
      %278 = vmatpush2.msra.mxu0 0.0
      %279 = vmatprep.subr.mxu0 0.0
      %280 = vmatpush2.msra.mxu0 0.0
      %281 = vmatprep.subr.mxu0 0.0
      %282 = vmatpush2.msra.mxu0 0.0
      %283 = vmatprep.subr.mxu0 0.0
      %284 = vmatpush2.msra.mxu0 0.0
      %285 = vmatprep.subr.mxu0 0.0
      %286 = vmatpush2.msra.mxu0 0.0
      %287 = vmatprep.subr.mxu0 0.0
      %288 = vmatpush2.msra.mxu0 0.0
      %289 = vmatprep.subr.mxu0 0.0
      %290 = vmatpush2.msra.mxu0 0.0
      %291 = vmatprep.subr.mxu0 0.0
      %292 = vmatpush2.msra.mxu0 0.0
      %293 = vmatprep.subr.mxu0 0.0
      %294 = vmatpush2.msra.mxu0 0.0
      %295 = vmatprep.subr.mxu0 0.0
      %296 = vmatpush2.msra.mxu0 0.0
      %297 = vmatprep.subr.mxu0 0.0
      %298 = vmatpush2.msra.mxu0 0.0
      %299 = vmatprep.subr.mxu0 0.0
      %300 = vmatpush2.msra.mxu0 0.0
      %301 = vmatprep.mubr.f32.mxu0 0.0
      %v302 = vand.u32 %v220, 4294901760
      %v303 = vsub.f32 %v220, %v302
      %v304 = vand.u32 %v303, 4294901760
      %v305 = vsub.f32 %v303, %v304
      %v306 = vand.u32 %v305, 4294901760
      %307 = vmatmul.mubr.f32.gmra.mxu0 %v306
      %v308 = vpop.f32.mrf.mxu0
      %v309 = vadd.f32 0.0, %v308
      %v310 = vpop.f32.mrf.mxu0
      %311 = vdwg.mxu0
      %312 = vmatprep.subr.mxu0 0.0
      %v313 = vand.u32 %v219, 4294901760
      %v314 = vsub.f32 %v219, %v313
      %v315 = vand.u32 %v314, 4294901760
      %v316 = vsub.f32 %v314, %v315
      %v317 = vand.u32 %v316, 4294901760
      %318 = vmatpush1.msra.mxu0 %v317
      %319 = vmatprep.subr.mxu0 0.0
      %v320 = vand.u32 %v218, 4294901760
      %v321 = vsub.f32 %v218, %v320
      %v322 = vand.u32 %v321, 4294901760
      %v323 = vsub.f32 %v321, %v322
      %v324 = vand.u32 %v323, 4294901760
      %325 = vmatpush1.msra.mxu0 %v324
      %326 = vmatprep.subr.mxu0 0.0
      %v327 = vand.u32 %v217, 4294901760
      %v328 = vsub.f32 %v217, %v327
      %v329 = vand.u32 %v328, 4294901760
      %v330 = vsub.f32 %v328, %v329
      %v331 = vand.u32 %v330, 4294901760
      %332 = vmatpush1.msra.mxu0 %v331
      %333 = vmatprep.subr.mxu0 0.0
      %v334 = vand.u32 %v216, 4294901760
      %v335 = vsub.f32 %v216, %v334
      %v336 = vand.u32 %v335, 4294901760
      %v337 = vsub.f32 %v335, %v336
      %v338 = vand.u32 %v337, 4294901760
      %339 = vmatpush1.msra.mxu0 %v338
      %340 = vmatprep.subr.mxu0 0.0
      %v341 = vand.u32 %v215, 4294901760
      %v342 = vsub.f32 %v215, %v341
      %v343 = vand.u32 %v342, 4294901760
      %v344 = vsub.f32 %v342, %v343
      %v345 = vand.u32 %v344, 4294901760
      %346 = vmatpush1.msra.mxu0 %v345
      %347 = vmatprep.subr.mxu0 0.0
      %v348 = vand.u32 %v214, 4294901760
      %v349 = vsub.f32 %v214, %v348
      %v350 = vand.u32 %v349, 4294901760
      %v351 = vsub.f32 %v349, %v350
      %v352 = vand.u32 %v351, 4294901760
      %353 = vmatpush1.msra.mxu0 %v352
      %354 = vmatprep.subr.mxu0 0.0
      %v355 = vand.u32 %v213, 4294901760
      %v356 = vsub.f32 %v213, %v355
      %v357 = vand.u32 %v356, 4294901760
      %v358 = vsub.f32 %v356, %v357
      %v359 = vand.u32 %v358, 4294901760
      %360 = vmatpush1.msra.mxu0 %v359
      %361 = vmatprep.subr.mxu0 0.0
      %v362 = vand.u32 %v212, 4294901760
      %v363 = vsub.f32 %v212, %v362
      %v364 = vand.u32 %v363, 4294901760
      %v365 = vsub.f32 %v363, %v364
      %v366 = vand.u32 %v365, 4294901760
      %367 = vmatpush1.msra.mxu0 %v366
      %368 = vmatprep.subr.mxu0 0.0
      %v369 = vand.u32 %v211, 4294901760
      %v370 = vsub.f32 %v211, %v369
      %v371 = vand.u32 %v370, 4294901760
      %v372 = vsub.f32 %v370, %v371
      %v373 = vand.u32 %v372, 4294901760
      %374 = vmatpush1.msra.mxu0 %v373
      %375 = vmatprep.subr.mxu0 0.0
      %v376 = vand.u32 %v210, 4294901760
      %v377 = vsub.f32 %v210, %v376
      %v378 = vand.u32 %v377, 4294901760
      %v379 = vsub.f32 %v377, %v378
      %v380 = vand.u32 %v379, 4294901760
      %381 = vmatpush1.msra.mxu0 %v380
      %382 = vmatprep.subr.mxu0 0.0
      %v383 = vand.u32 %v209, 4294901760
      %v384 = vsub.f32 %v209, %v383
      %v385 = vand.u32 %v384, 4294901760
      %v386 = vsub.f32 %v384, %v385
      %v387 = vand.u32 %v386, 4294901760
      %388 = vmatpush1.msra.mxu0 %v387
      %389 = vmatprep.subr.mxu0 0.0
      %v390 = vand.u32 %v208, 4294901760
      %v391 = vsub.f32 %v208, %v390
      %v392 = vand.u32 %v391, 4294901760
      %v393 = vsub.f32 %v391, %v392
      %v394 = vand.u32 %v393, 4294901760
      %395 = vmatpush1.msra.mxu0 %v394
      %396 = vmatprep.subr.mxu0 0.0
      %v397 = vand.u32 %v207, 4294901760
      %v398 = vsub.f32 %v207, %v397
      %v399 = vand.u32 %v398, 4294901760
      %v400 = vsub.f32 %v398, %v399
      %v401 = vand.u32 %v400, 4294901760
      %402 = vmatpush1.msra.mxu0 %v401
      %403 = vmatprep.subr.mxu0 0.0
      %v404 = vand.u32 %v206, 4294901760
      %v405 = vsub.f32 %v206, %v404
      %v406 = vand.u32 %v405, 4294901760
      %v407 = vsub.f32 %v405, %v406
      %v408 = vand.u32 %v407, 4294901760
      %409 = vmatpush1.msra.mxu0 %v408
      %410 = vmatprep.subr.mxu0 0.0
      %v411 = vand.u32 %v205, 4294901760
      %v412 = vsub.f32 %v205, %v411
      %v413 = vand.u32 %v412, 4294901760
      %v414 = vsub.f32 %v412, %v413
      %v415 = vand.u32 %v414, 4294901760
      %416 = vmatpush1.msra.mxu0 %v415
      %417 = vmatprep.subr.mxu0 0.0
      %v418 = vand.u32 %v204, 4294901760
      %v419 = vsub.f32 %v204, %v418
      %v420 = vand.u32 %v419, 4294901760
      %v421 = vsub.f32 %v419, %v420
      %v422 = vand.u32 %v421, 4294901760
      %423 = vmatpush1.msra.mxu0 %v422
      %424 = vmatprep.subr.mxu0 0.0
      %425 = vmatpush2.msra.mxu0 0.0
      %426 = vmatprep.subr.mxu0 0.0
      %427 = vmatpush2.msra.mxu0 0.0
      %428 = vmatprep.subr.mxu0 0.0
      %429 = vmatpush2.msra.mxu0 0.0
      %430 = vmatprep.subr.mxu0 0.0
      %431 = vmatpush2.msra.mxu0 0.0
      %432 = vmatprep.subr.mxu0 0.0
      %433 = vmatpush2.msra.mxu0 0.0
      %434 = vmatprep.subr.mxu0 0.0
      %435 = vmatpush2.msra.mxu0 0.0
      %436 = vmatprep.subr.mxu0 0.0
      %437 = vmatpush2.msra.mxu0 0.0
      %438 = vmatprep.subr.mxu0 0.0
      %439 = vmatpush2.msra.mxu0 0.0
      %440 = vmatprep.subr.mxu0 0.0
      %441 = vmatpush2.msra.mxu0 0.0
      %442 = vmatprep.subr.mxu0 0.0
      %443 = vmatpush2.msra.mxu0 0.0
      %444 = vmatprep.subr.mxu0 0.0
      %445 = vmatpush2.msra.mxu0 0.0
      %446 = vmatprep.subr.mxu0 0.0
      %447 = vmatpush2.msra.mxu0 0.0
      %448 = vmatprep.subr.mxu0 0.0
      %449 = vmatpush2.msra.mxu0 0.0
      %450 = vmatprep.subr.mxu0 0.0
      %451 = vmatpush2.msra.mxu0 0.0
      %452 = vmatprep.subr.mxu0 0.0
      %453 = vmatpush2.msra.mxu0 0.0
      %454 = vmatprep.subr.mxu0 0.0
      %455 = vmatpush2.msra.mxu0 0.0
      %456 = vmatprep.mubr.f32.mxu0 0.0
      %v457 = vand.u32 %v220, 4294901760
      %458 = vmatmul.mubr.f32.gmra.mxu0 %v457
      %v459 = vpop.f32.mrf.mxu0
      %v460 = vadd.f32 %v309, %v459
      %v461 = vpop.f32.mrf.mxu0
      %462 = vdwg.mxu0
      %463 = vmatprep.subr.mxu0 0.0
      %v464 = vand.u32 %v219, 4294901760
      %v465 = vsub.f32 %v219, %v464
      %466 = vmatpush1.msra.mxu0 %v465
      %467 = vmatprep.subr.mxu0 0.0
      %v468 = vand.u32 %v218, 4294901760
      %v469 = vsub.f32 %v218, %v468
      %470 = vmatpush1.msra.mxu0 %v469
      %471 = vmatprep.subr.mxu0 0.0
      %v472 = vand.u32 %v217, 4294901760
      %v473 = vsub.f32 %v217, %v472
      %474 = vmatpush1.msra.mxu0 %v473
      %475 = vmatprep.subr.mxu0 0.0
      %v476 = vand.u32 %v216, 4294901760
      %v477 = vsub.f32 %v216, %v476
      %478 = vmatpush1.msra.mxu0 %v477
      %479 = vmatprep.subr.mxu0 0.0
      %v480 = vand.u32 %v215, 4294901760
      %v481 = vsub.f32 %v215, %v480
      %482 = vmatpush1.msra.mxu0 %v481
      %483 = vmatprep.subr.mxu0 0.0
      %v484 = vand.u32 %v214, 4294901760
      %v485 = vsub.f32 %v214, %v484
      %486 = vmatpush1.msra.mxu0 %v485
      %487 = vmatprep.subr.mxu0 0.0
      %v488 = vand.u32 %v213, 4294901760
      %v489 = vsub.f32 %v213, %v488
      %490 = vmatpush1.msra.mxu0 %v489
      %491 = vmatprep.subr.mxu0 0.0
      %v492 = vand.u32 %v212, 4294901760
      %v493 = vsub.f32 %v212, %v492
      %494 = vmatpush1.msra.mxu0 %v493
      %495 = vmatprep.subr.mxu0 0.0
      %v496 = vand.u32 %v211, 4294901760
      %v497 = vsub.f32 %v211, %v496
      %498 = vmatpush1.msra.mxu0 %v497
      %499 = vmatprep.subr.mxu0 0.0
      %v500 = vand.u32 %v210, 4294901760
      %v501 = vsub.f32 %v210, %v500
      %502 = vmatpush1.msra.mxu0 %v501
      %503 = vmatprep.subr.mxu0 0.0
      %v504 = vand.u32 %v209, 4294901760
      %v505 = vsub.f32 %v209, %v504
      %506 = vmatpush1.msra.mxu0 %v505
      %507 = vmatprep.subr.mxu0 0.0
      %v508 = vand.u32 %v208, 4294901760
      %v509 = vsub.f32 %v208, %v508
      %510 = vmatpush1.msra.mxu0 %v509
      %511 = vmatprep.subr.mxu0 0.0
      %v512 = vand.u32 %v207, 4294901760
      %v513 = vsub.f32 %v207, %v512
      %514 = vmatpush1.msra.mxu0 %v513
      %515 = vmatprep.subr.mxu0 0.0
      %v516 = vand.u32 %v206, 4294901760
      %v517 = vsub.f32 %v206, %v516
      %518 = vmatpush1.msra.mxu0 %v517
      %519 = vmatprep.subr.mxu0 0.0
      %v520 = vand.u32 %v205, 4294901760
      %v521 = vsub.f32 %v205, %v520
      %522 = vmatpush1.msra.mxu0 %v521
      %523 = vmatprep.subr.mxu0 0.0
      %v524 = vand.u32 %v204, 4294901760
      %v525 = vsub.f32 %v204, %v524
      %526 = vmatpush1.msra.mxu0 %v525
      %527 = vmatprep.subr.mxu0 0.0
      %528 = vmatpush2.msra.mxu0 0.0
      %529 = vmatprep.subr.mxu0 0.0
      %530 = vmatpush2.msra.mxu0 0.0
      %531 = vmatprep.subr.mxu0 0.0
      %532 = vmatpush2.msra.mxu0 0.0
      %533 = vmatprep.subr.mxu0 0.0
      %534 = vmatpush2.msra.mxu0 0.0
      %535 = vmatprep.subr.mxu0 0.0
      %536 = vmatpush2.msra.mxu0 0.0
      %537 = vmatprep.subr.mxu0 0.0
      %538 = vmatpush2.msra.mxu0 0.0
      %539 = vmatprep.subr.mxu0 0.0
      %540 = vmatpush2.msra.mxu0 0.0
      %541 = vmatprep.subr.mxu0 0.0
      %542 = vmatpush2.msra.mxu0 0.0
      %543 = vmatprep.subr.mxu0 0.0
      %544 = vmatpush2.msra.mxu0 0.0
      %545 = vmatprep.subr.mxu0 0.0
      %546 = vmatpush2.msra.mxu0 0.0
      %547 = vmatprep.subr.mxu0 0.0
      %548 = vmatpush2.msra.mxu0 0.0
      %549 = vmatprep.subr.mxu0 0.0
      %550 = vmatpush2.msra.mxu0 0.0
      %551 = vmatprep.subr.mxu0 0.0
      %552 = vmatpush2.msra.mxu0 0.0
      %553 = vmatprep.subr.mxu0 0.0
      %554 = vmatpush2.msra.mxu0 0.0
      %555 = vmatprep.subr.mxu0 0.0
      %556 = vmatpush2.msra.mxu0 0.0
      %557 = vmatprep.subr.mxu0 0.0
      %558 = vmatpush2.msra.mxu0 0.0
      %559 = vmatprep.mubr.f32.mxu0 0.0
      %v560 = vand.u32 %v220, 4294901760
      %v561 = vsub.f32 %v220, %v560
      %562 = vmatmul.mubr.f32.gmra.mxu0 %v561
      %v563 = vpop.f32.mrf.mxu0
      %v564 = vadd.f32 %v460, %v563
      %v565 = vpop.f32.mrf.mxu0
      %566 = vdwg.mxu0
      %567 = vmatprep.subr.mxu0 0.0
      %v568 = vand.u32 %v219, 4294901760
      %569 = vmatpush1.msra.mxu0 %v568
      %570 = vmatprep.subr.mxu0 0.0
      %v571 = vand.u32 %v218, 4294901760
      %572 = vmatpush1.msra.mxu0 %v571
      %573 = vmatprep.subr.mxu0 0.0
      %v574 = vand.u32 %v217, 4294901760
      %575 = vmatpush1.msra.mxu0 %v574
      %576 = vmatprep.subr.mxu0 0.0
      %v577 = vand.u32 %v216, 4294901760
      %578 = vmatpush1.msra.mxu0 %v577
      %579 = vmatprep.subr.mxu0 0.0
      %v580 = vand.u32 %v215, 4294901760
      %581 = vmatpush1.msra.mxu0 %v580
      %582 = vmatprep.subr.mxu0 0.0
      %v583 = vand.u32 %v214, 4294901760
      %584 = vmatpush1.msra.mxu0 %v583
      %585 = vmatprep.subr.mxu0 0.0
      %v586 = vand.u32 %v213, 4294901760
      %587 = vmatpush1.msra.mxu0 %v586
      %588 = vmatprep.subr.mxu0 0.0
      %v589 = vand.u32 %v212, 4294901760
      %590 = vmatpush1.msra.mxu0 %v589
      %591 = vmatprep.subr.mxu0 0.0
      %v592 = vand.u32 %v211, 4294901760
      %593 = vmatpush1.msra.mxu0 %v592
      %594 = vmatprep.subr.mxu0 0.0
      %v595 = vand.u32 %v210, 4294901760
      %596 = vmatpush1.msra.mxu0 %v595
      %597 = vmatprep.subr.mxu0 0.0
      %v598 = vand.u32 %v209, 4294901760
      %599 = vmatpush1.msra.mxu0 %v598
      %600 = vmatprep.subr.mxu0 0.0
      %v601 = vand.u32 %v208, 4294901760
      %602 = vmatpush1.msra.mxu0 %v601
      %603 = vmatprep.subr.mxu0 0.0
      %v604 = vand.u32 %v207, 4294901760
      %605 = vmatpush1.msra.mxu0 %v604
      %606 = vmatprep.subr.mxu0 0.0
      %v607 = vand.u32 %v206, 4294901760
      %608 = vmatpush1.msra.mxu0 %v607
      %609 = vmatprep.subr.mxu0 0.0
      %v610 = vand.u32 %v205, 4294901760
      %611 = vmatpush1.msra.mxu0 %v610
      %612 = vmatprep.subr.mxu0 0.0
      %v613 = vand.u32 %v204, 4294901760
      %614 = vmatpush1.msra.mxu0 %v613
      %615 = vmatprep.subr.mxu0 0.0
      %616 = vmatpush2.msra.mxu0 0.0
      %617 = vmatprep.subr.mxu0 0.0
      %618 = vmatpush2.msra.mxu0 0.0
      %619 = vmatprep.subr.mxu0 0.0
      %620 = vmatpush2.msra.mxu0 0.0
      %621 = vmatprep.subr.mxu0 0.0
      %622 = vmatpush2.msra.mxu0 0.0
      %623 = vmatprep.subr.mxu0 0.0
      %624 = vmatpush2.msra.mxu0 0.0
      %625 = vmatprep.subr.mxu0 0.0
      %626 = vmatpush2.msra.mxu0 0.0
      %627 = vmatprep.subr.mxu0 0.0
      %628 = vmatpush2.msra.mxu0 0.0
      %629 = vmatprep.subr.mxu0 0.0
      %630 = vmatpush2.msra.mxu0 0.0
      %631 = vmatprep.subr.mxu0 0.0
      %632 = vmatpush2.msra.mxu0 0.0
      %633 = vmatprep.subr.mxu0 0.0
      %634 = vmatpush2.msra.mxu0 0.0
      %635 = vmatprep.subr.mxu0 0.0
      %636 = vmatpush2.msra.mxu0 0.0
      %637 = vmatprep.subr.mxu0 0.0
      %638 = vmatpush2.msra.mxu0 0.0
      %639 = vmatprep.subr.mxu0 0.0
      %640 = vmatpush2.msra.mxu0 0.0
      %641 = vmatprep.subr.mxu0 0.0
      %642 = vmatpush2.msra.mxu0 0.0
      %643 = vmatprep.subr.mxu0 0.0
      %644 = vmatpush2.msra.mxu0 0.0
      %645 = vmatprep.subr.mxu0 0.0
      %646 = vmatpush2.msra.mxu0 0.0
      %647 = vmatprep.mubr.f32.mxu0 0.0
      %v648 = vand.u32 %v220, 4294901760
      %v649 = vsub.f32 %v220, %v648
      %v650 = vand.u32 %v649, 4294901760
      %651 = vmatmul.mubr.f32.gmra.mxu0 %v650
      %v652 = vpop.f32.mrf.mxu0
      %v653 = vadd.f32 %v564, %v652
      %v654 = vpop.f32.mrf.mxu0
      %655 = vdwg.mxu0
      %656 = vmatprep.subr.mxu0 0.0
      %v657 = vand.u32 %v219, 4294901760
      %v658 = vsub.f32 %v219, %v657
      %v659 = vand.u32 %v658, 4294901760
      %660 = vmatpush1.msra.mxu0 %v659
      %661 = vmatprep.subr.mxu0 0.0
      %v662 = vand.u32 %v218, 4294901760
      %v663 = vsub.f32 %v218, %v662
      %v664 = vand.u32 %v663, 4294901760
      %665 = vmatpush1.msra.mxu0 %v664
      %666 = vmatprep.subr.mxu0 0.0
      %v667 = vand.u32 %v217, 4294901760
      %v668 = vsub.f32 %v217, %v667
      %v669 = vand.u32 %v668, 4294901760
      %670 = vmatpush1.msra.mxu0 %v669
      %671 = vmatprep.subr.mxu0 0.0
      %v672 = vand.u32 %v216, 4294901760
      %v673 = vsub.f32 %v216, %v672
      %v674 = vand.u32 %v673, 4294901760
      %675 = vmatpush1.msra.mxu0 %v674
      %676 = vmatprep.subr.mxu0 0.0
      %v677 = vand.u32 %v215, 4294901760
      %v678 = vsub.f32 %v215, %v677
      %v679 = vand.u32 %v678, 4294901760
      %680 = vmatpush1.msra.mxu0 %v679
      %681 = vmatprep.subr.mxu0 0.0
      %v682 = vand.u32 %v214, 4294901760
      %v683 = vsub.f32 %v214, %v682
      %v684 = vand.u32 %v683, 4294901760
      %685 = vmatpush1.msra.mxu0 %v684
      %686 = vmatprep.subr.mxu0 0.0
      %v687 = vand.u32 %v213, 4294901760
      %v688 = vsub.f32 %v213, %v687
      %v689 = vand.u32 %v688, 4294901760
      %690 = vmatpush1.msra.mxu0 %v689
      %691 = vmatprep.subr.mxu0 0.0
      %v692 = vand.u32 %v212, 4294901760
      %v693 = vsub.f32 %v212, %v692
      %v694 = vand.u32 %v693, 4294901760
      %695 = vmatpush1.msra.mxu0 %v694
      %696 = vmatprep.subr.mxu0 0.0
      %v697 = vand.u32 %v211, 4294901760
      %v698 = vsub.f32 %v211, %v697
      %v699 = vand.u32 %v698, 4294901760
      %700 = vmatpush1.msra.mxu0 %v699
      %701 = vmatprep.subr.mxu0 0.0
      %v702 = vand.u32 %v210, 4294901760
      %v703 = vsub.f32 %v210, %v702
      %v704 = vand.u32 %v703, 4294901760
      %705 = vmatpush1.msra.mxu0 %v704
      %706 = vmatprep.subr.mxu0 0.0
      %v707 = vand.u32 %v209, 4294901760
      %v708 = vsub.f32 %v209, %v707
      %v709 = vand.u32 %v708, 4294901760
      %710 = vmatpush1.msra.mxu0 %v709
      %711 = vmatprep.subr.mxu0 0.0
      %v712 = vand.u32 %v208, 4294901760
      %v713 = vsub.f32 %v208, %v712
      %v714 = vand.u32 %v713, 4294901760
      %715 = vmatpush1.msra.mxu0 %v714
      %716 = vmatprep.subr.mxu0 0.0
      %v717 = vand.u32 %v207, 4294901760
      %v718 = vsub.f32 %v207, %v717
      %v719 = vand.u32 %v718, 4294901760
      %720 = vmatpush1.msra.mxu0 %v719
      %721 = vmatprep.subr.mxu0 0.0
      %v722 = vand.u32 %v206, 4294901760
      %v723 = vsub.f32 %v206, %v722
      %v724 = vand.u32 %v723, 4294901760
      %725 = vmatpush1.msra.mxu0 %v724
      %726 = vmatprep.subr.mxu0 0.0
      %v727 = vand.u32 %v205, 4294901760
      %v728 = vsub.f32 %v205, %v727
      %v729 = vand.u32 %v728, 4294901760
      %730 = vmatpush1.msra.mxu0 %v729
      %731 = vmatprep.subr.mxu0 0.0
      %v732 = vand.u32 %v204, 4294901760
      %v733 = vsub.f32 %v204, %v732
      %v734 = vand.u32 %v733, 4294901760
      %735 = vmatpush1.msra.mxu0 %v734
      %736 = vmatprep.subr.mxu0 0.0
      %737 = vmatpush2.msra.mxu0 0.0
      %738 = vmatprep.subr.mxu0 0.0
      %739 = vmatpush2.msra.mxu0 0.0
      %740 = vmatprep.subr.mxu0 0.0
      %741 = vmatpush2.msra.mxu0 0.0
      %742 = vmatprep.subr.mxu0 0.0
      %743 = vmatpush2.msra.mxu0 0.0
      %744 = vmatprep.subr.mxu0 0.0
      %745 = vmatpush2.msra.mxu0 0.0
      %746 = vmatprep.subr.mxu0 0.0
      %747 = vmatpush2.msra.mxu0 0.0
      %748 = vmatprep.subr.mxu0 0.0
      %749 = vmatpush2.msra.mxu0 0.0
      %750 = vmatprep.subr.mxu0 0.0
      %751 = vmatpush2.msra.mxu0 0.0
      %752 = vmatprep.subr.mxu0 0.0
      %753 = vmatpush2.msra.mxu0 0.0
      %754 = vmatprep.subr.mxu0 0.0
      %755 = vmatpush2.msra.mxu0 0.0
      %756 = vmatprep.subr.mxu0 0.0
      %757 = vmatpush2.msra.mxu0 0.0
      %758 = vmatprep.subr.mxu0 0.0
      %759 = vmatpush2.msra.mxu0 0.0
      %760 = vmatprep.subr.mxu0 0.0
      %761 = vmatpush2.msra.mxu0 0.0
      %762 = vmatprep.subr.mxu0 0.0
      %763 = vmatpush2.msra.mxu0 0.0
      %764 = vmatprep.subr.mxu0 0.0
      %765 = vmatpush2.msra.mxu0 0.0
      %766 = vmatprep.subr.mxu0 0.0
      %767 = vmatpush2.msra.mxu0 0.0
      %768 = vmatprep.mubr.f32.mxu0 0.0
      %v769 = vand.u32 %v220, 4294901760
      %770 = vmatmul.mubr.f32.gmra.mxu0 %v769
      %v771 = vpop.f32.mrf.mxu0
      %v772 = vadd.f32 %v653, %v771
      %v773 = vpop.f32.mrf.mxu0
      %774 = vdwg.mxu0
      %775 = vmatprep.subr.mxu0 0.0
      %v776 = vand.u32 %v219, 4294901760
      %777 = vmatpush1.msra.mxu0 %v776
      %778 = vmatprep.subr.mxu0 0.0
      %v779 = vand.u32 %v218, 4294901760
      %780 = vmatpush1.msra.mxu0 %v779
      %781 = vmatprep.subr.mxu0 0.0
      %v782 = vand.u32 %v217, 4294901760
      %783 = vmatpush1.msra.mxu0 %v782
      %784 = vmatprep.subr.mxu0 0.0
      %v785 = vand.u32 %v216, 4294901760
      %786 = vmatpush1.msra.mxu0 %v785
      %787 = vmatprep.subr.mxu0 0.0
      %v788 = vand.u32 %v215, 4294901760
      %789 = vmatpush1.msra.mxu0 %v788
      %790 = vmatprep.subr.mxu0 0.0
      %v791 = vand.u32 %v214, 4294901760
      %792 = vmatpush1.msra.mxu0 %v791
      %793 = vmatprep.subr.mxu0 0.0
      %v794 = vand.u32 %v213, 4294901760
      %795 = vmatpush1.msra.mxu0 %v794
      %796 = vmatprep.subr.mxu0 0.0
      %v797 = vand.u32 %v212, 4294901760
      %798 = vmatpush1.msra.mxu0 %v797
      %799 = vmatprep.subr.mxu0 0.0
      %v800 = vand.u32 %v211, 4294901760
      %801 = vmatpush1.msra.mxu0 %v800
      %802 = vmatprep.subr.mxu0 0.0
      %v803 = vand.u32 %v210, 4294901760
      %804 = vmatpush1.msra.mxu0 %v803
      %805 = vmatprep.subr.mxu0 0.0
      %v806 = vand.u32 %v209, 4294901760
      %807 = vmatpush1.msra.mxu0 %v806
      %808 = vmatprep.subr.mxu0 0.0
      %v809 = vand.u32 %v208, 4294901760
      %810 = vmatpush1.msra.mxu0 %v809
      %811 = vmatprep.subr.mxu0 0.0
      %v812 = vand.u32 %v207, 4294901760
      %813 = vmatpush1.msra.mxu0 %v812
      %814 = vmatprep.subr.mxu0 0.0
      %v815 = vand.u32 %v206, 4294901760
      %816 = vmatpush1.msra.mxu0 %v815
      %817 = vmatprep.subr.mxu0 0.0
      %v818 = vand.u32 %v205, 4294901760
      %819 = vmatpush1.msra.mxu0 %v818
      %820 = vmatprep.subr.mxu0 0.0
      %v821 = vand.u32 %v204, 4294901760
      %822 = vmatpush1.msra.mxu0 %v821
      %823 = vmatprep.subr.mxu0 0.0
      %824 = vmatpush2.msra.mxu0 0.0
      %825 = vmatprep.subr.mxu0 0.0
      %826 = vmatpush2.msra.mxu0 0.0
      %827 = vmatprep.subr.mxu0 0.0
      %828 = vmatpush2.msra.mxu0 0.0
      %829 = vmatprep.subr.mxu0 0.0
      %830 = vmatpush2.msra.mxu0 0.0
      %831 = vmatprep.subr.mxu0 0.0
      %832 = vmatpush2.msra.mxu0 0.0
      %833 = vmatprep.subr.mxu0 0.0
      %834 = vmatpush2.msra.mxu0 0.0
      %835 = vmatprep.subr.mxu0 0.0
      %836 = vmatpush2.msra.mxu0 0.0
      %837 = vmatprep.subr.mxu0 0.0
      %838 = vmatpush2.msra.mxu0 0.0
      %839 = vmatprep.subr.mxu0 0.0
      %840 = vmatpush2.msra.mxu0 0.0
      %841 = vmatprep.subr.mxu0 0.0
      %842 = vmatpush2.msra.mxu0 0.0
      %843 = vmatprep.subr.mxu0 0.0
      %844 = vmatpush2.msra.mxu0 0.0
      %845 = vmatprep.subr.mxu0 0.0
      %846 = vmatpush2.msra.mxu0 0.0
      %847 = vmatprep.subr.mxu0 0.0
      %848 = vmatpush2.msra.mxu0 0.0
      %849 = vmatprep.subr.mxu0 0.0
      %850 = vmatpush2.msra.mxu0 0.0
      %851 = vmatprep.subr.mxu0 0.0
      %852 = vmatpush2.msra.mxu0 0.0
      %853 = vmatprep.subr.mxu0 0.0
      %854 = vmatpush2.msra.mxu0 0.0
      %855 = vmatprep.mubr.f32.mxu0 0.0
      %v856 = vand.u32 %v220, 4294901760
      %857 = vmatmul.mubr.f32.gmra.mxu0 %v856
      %v858 = vpop.f32.mrf.mxu0
      %v859 = vadd.f32 %v772, %v858
      %v860 = vpop.f32.mrf.mxu0
      %861 = vdwg.mxu0
      %v862 = vmul.f32 %v220, %v220
      %863 = vmatprep.subr.mxu0 0.0
      %v864 = vand.u32 %v219, 4294901760
      %865 = vmatpush1.msra.mxu0 %v864
      %866 = vmatprep.subr.mxu0 0.0
      %v867 = vand.u32 %v218, 4294901760
      %868 = vmatpush1.msra.mxu0 %v867
      %869 = vmatprep.subr.mxu0 0.0
      %v870 = vand.u32 %v217, 4294901760
      %871 = vmatpush1.msra.mxu0 %v870
      %872 = vmatprep.subr.mxu0 0.0
      %v873 = vand.u32 %v216, 4294901760
      %874 = vmatpush1.msra.mxu0 %v873
      %875 = vmatprep.subr.mxu0 0.0
      %v876 = vand.u32 %v215, 4294901760
      %877 = vmatpush1.msra.mxu0 %v876
      %878 = vmatprep.subr.mxu0 0.0
      %v879 = vand.u32 %v214, 4294901760
      %880 = vmatpush1.msra.mxu0 %v879
      %881 = vmatprep.subr.mxu0 0.0
      %v882 = vand.u32 %v213, 4294901760
      %883 = vmatpush1.msra.mxu0 %v882
      %884 = vmatprep.subr.mxu0 0.0
      %v885 = vand.u32 %v212, 4294901760
      %886 = vmatpush1.msra.mxu0 %v885
      %887 = vmatprep.subr.mxu0 0.0
      %v888 = vand.u32 %v211, 4294901760
      %889 = vmatpush1.msra.mxu0 %v888
      %890 = vmatprep.subr.mxu0 0.0
      %v891 = vand.u32 %v210, 4294901760
      %892 = vmatpush1.msra.mxu0 %v891
      %893 = vmatprep.subr.mxu0 0.0
      %v894 = vand.u32 %v209, 4294901760
      %895 = vmatpush1.msra.mxu0 %v894
      %896 = vmatprep.subr.mxu0 0.0
      %v897 = vand.u32 %v208, 4294901760
      %898 = vmatpush1.msra.mxu0 %v897
      %899 = vmatprep.subr.mxu0 0.0
      %v900 = vand.u32 %v207, 4294901760
      %901 = vmatpush1.msra.mxu0 %v900
      %902 = vmatprep.subr.mxu0 0.0
      %v903 = vand.u32 %v206, 4294901760
      %904 = vmatpush1.msra.mxu0 %v903
      %905 = vmatprep.subr.mxu0 0.0
      %v906 = vand.u32 %v205, 4294901760
      %907 = vmatpush1.msra.mxu0 %v906
      %908 = vmatprep.subr.mxu0 0.0
      %v909 = vand.u32 %v204, 4294901760
      %910 = vmatpush1.msra.mxu0 %v909
      %911 = vmatprep.subr.mxu0 0.0
      %912 = vmatpush2.msra.mxu0 0.0
      %913 = vmatprep.subr.mxu0 0.0
      %914 = vmatpush2.msra.mxu0 0.0
      %915 = vmatprep.subr.mxu0 0.0
      %916 = vmatpush2.msra.mxu0 0.0
      %917 = vmatprep.subr.mxu0 0.0
      %918 = vmatpush2.msra.mxu0 0.0
      %919 = vmatprep.subr.mxu0 0.0
      %920 = vmatpush2.msra.mxu0 0.0
      %921 = vmatprep.subr.mxu0 0.0
      %922 = vmatpush2.msra.mxu0 0.0
      %923 = vmatprep.subr.mxu0 0.0
      %924 = vmatpush2.msra.mxu0 0.0
      %925 = vmatprep.subr.mxu0 0.0
      %926 = vmatpush2.msra.mxu0 0.0
      %927 = vmatprep.subr.mxu0 0.0
      %928 = vmatpush2.msra.mxu0 0.0
      %929 = vmatprep.subr.mxu0 0.0
      %930 = vmatpush2.msra.mxu0 0.0
      %931 = vmatprep.subr.mxu0 0.0
      %932 = vmatpush2.msra.mxu0 0.0
      %933 = vmatprep.subr.mxu0 0.0
      %934 = vmatpush2.msra.mxu0 0.0
      %935 = vmatprep.subr.mxu0 0.0
      %936 = vmatpush2.msra.mxu0 0.0
      %937 = vmatprep.subr.mxu0 0.0
      %938 = vmatpush2.msra.mxu0 0.0
      %939 = vmatprep.subr.mxu0 0.0
      %940 = vmatpush2.msra.mxu0 0.0
      %941 = vmatprep.subr.mxu0 0.0
      %942 = vmatpush2.msra.mxu0 0.0
      %943 = vmatprep.mubr.f32.mxu0 0.0
      %v944 = vand.u32 %v862, 4294901760
      %v945 = vsub.f32 %v862, %v944
      %v946 = vand.u32 %v945, 4294901760
      %v947 = vsub.f32 %v945, %v946
      %v948 = vand.u32 %v947, 4294901760
      %949 = vmatmul.mubr.f32.gmra.mxu0 %v948
      %v950 = vpop.f32.mrf.mxu0
      %v951 = vadd.f32 0.0, %v950
      %v952 = vpop.f32.mrf.mxu0
      %953 = vdwg.mxu0
      %954 = vmatprep.subr.mxu0 0.0
      %v955 = vand.u32 %v219, 4294901760
      %v956 = vsub.f32 %v219, %v955
      %v957 = vand.u32 %v956, 4294901760
      %v958 = vsub.f32 %v956, %v957
      %v959 = vand.u32 %v958, 4294901760
      %960 = vmatpush1.msra.mxu0 %v959
      %961 = vmatprep.subr.mxu0 0.0
      %v962 = vand.u32 %v218, 4294901760
      %v963 = vsub.f32 %v218, %v962
      %v964 = vand.u32 %v963, 4294901760
      %v965 = vsub.f32 %v963, %v964
      %v966 = vand.u32 %v965, 4294901760
      %967 = vmatpush1.msra.mxu0 %v966
      %968 = vmatprep.subr.mxu0 0.0
      %v969 = vand.u32 %v217, 4294901760
      %v970 = vsub.f32 %v217, %v969
      %v971 = vand.u32 %v970, 4294901760
      %v972 = vsub.f32 %v970, %v971
      %v973 = vand.u32 %v972, 4294901760
      %974 = vmatpush1.msra.mxu0 %v973
      %975 = vmatprep.subr.mxu0 0.0
      %v976 = vand.u32 %v216, 4294901760
      %v977 = vsub.f32 %v216, %v976
      %v978 = vand.u32 %v977, 4294901760
      %v979 = vsub.f32 %v977, %v978
      %v980 = vand.u32 %v979, 4294901760
      %981 = vmatpush1.msra.mxu0 %v980
      %982 = vmatprep.subr.mxu0 0.0
      %v983 = vand.u32 %v215, 4294901760
      %v984 = vsub.f32 %v215, %v983
      %v985 = vand.u32 %v984, 4294901760
      %v986 = vsub.f32 %v984, %v985
      %v987 = vand.u32 %v986, 4294901760
      %988 = vmatpush1.msra.mxu0 %v987
      %989 = vmatprep.subr.mxu0 0.0
      %v990 = vand.u32 %v214, 4294901760
      %v991 = vsub.f32 %v214, %v990
      %v992 = vand.u32 %v991, 4294901760
      %v993 = vsub.f32 %v991, %v992
      %v994 = vand.u32 %v993, 4294901760
      %995 = vmatpush1.msra.mxu0 %v994
      %996 = vmatprep.subr.mxu0 0.0
      %v997 = vand.u32 %v213, 4294901760
      %v998 = vsub.f32 %v213, %v997
      %v999 = vand.u32 %v998, 4294901760
      %v1000 = vsub.f32 %v998, %v999
      %v1001 = vand.u32 %v1000, 4294901760
      %1002 = vmatpush1.msra.mxu0 %v1001
      %1003 = vmatprep.subr.mxu0 0.0
      %v1004 = vand.u32 %v212, 4294901760
      %v1005 = vsub.f32 %v212, %v1004
      %v1006 = vand.u32 %v1005, 4294901760
      %v1007 = vsub.f32 %v1005, %v1006
      %v1008 = vand.u32 %v1007, 4294901760
      %1009 = vmatpush1.msra.mxu0 %v1008
      %1010 = vmatprep.subr.mxu0 0.0
      %v1011 = vand.u32 %v211, 4294901760
      %v1012 = vsub.f32 %v211, %v1011
      %v1013 = vand.u32 %v1012, 4294901760
      %v1014 = vsub.f32 %v1012, %v1013
      %v1015 = vand.u32 %v1014, 4294901760
      %1016 = vmatpush1.msra.mxu0 %v1015
      %1017 = vmatprep.subr.mxu0 0.0
      %v1018 = vand.u32 %v210, 4294901760
      %v1019 = vsub.f32 %v210, %v1018
      %v1020 = vand.u32 %v1019, 4294901760
      %v1021 = vsub.f32 %v1019, %v1020
      %v1022 = vand.u32 %v1021, 4294901760
      %1023 = vmatpush1.msra.mxu0 %v1022
      %1024 = vmatprep.subr.mxu0 0.0
      %v1025 = vand.u32 %v209, 4294901760
      %v1026 = vsub.f32 %v209, %v1025
      %v1027 = vand.u32 %v1026, 4294901760
      %v1028 = vsub.f32 %v1026, %v1027
      %v1029 = vand.u32 %v1028, 4294901760
      %1030 = vmatpush1.msra.mxu0 %v1029
      %1031 = vmatprep.subr.mxu0 0.0
      %v1032 = vand.u32 %v208, 4294901760
      %v1033 = vsub.f32 %v208, %v1032
      %v1034 = vand.u32 %v1033, 4294901760
      %v1035 = vsub.f32 %v1033, %v1034
      %v1036 = vand.u32 %v1035, 4294901760
      %1037 = vmatpush1.msra.mxu0 %v1036
      %1038 = vmatprep.subr.mxu0 0.0
      %v1039 = vand.u32 %v207, 4294901760
      %v1040 = vsub.f32 %v207, %v1039
      %v1041 = vand.u32 %v1040, 4294901760
      %v1042 = vsub.f32 %v1040, %v1041
      %v1043 = vand.u32 %v1042, 4294901760
      %1044 = vmatpush1.msra.mxu0 %v1043
      %1045 = vmatprep.subr.mxu0 0.0
      %v1046 = vand.u32 %v206, 4294901760
      %v1047 = vsub.f32 %v206, %v1046
      %v1048 = vand.u32 %v1047, 4294901760
      %v1049 = vsub.f32 %v1047, %v1048
      %v1050 = vand.u32 %v1049, 4294901760
      %1051 = vmatpush1.msra.mxu0 %v1050
      %1052 = vmatprep.subr.mxu0 0.0
      %v1053 = vand.u32 %v205, 4294901760
      %v1054 = vsub.f32 %v205, %v1053
      %v1055 = vand.u32 %v1054, 4294901760
      %v1056 = vsub.f32 %v1054, %v1055
      %v1057 = vand.u32 %v1056, 4294901760
      %1058 = vmatpush1.msra.mxu0 %v1057
      %1059 = vmatprep.subr.mxu0 0.0
      %v1060 = vand.u32 %v204, 4294901760
      %v1061 = vsub.f32 %v204, %v1060
      %v1062 = vand.u32 %v1061, 4294901760
      %v1063 = vsub.f32 %v1061, %v1062
      %v1064 = vand.u32 %v1063, 4294901760
      %1065 = vmatpush1.msra.mxu0 %v1064
      %1066 = vmatprep.subr.mxu0 0.0
      %1067 = vmatpush2.msra.mxu0 0.0
      %1068 = vmatprep.subr.mxu0 0.0
      %1069 = vmatpush2.msra.mxu0 0.0
      %1070 = vmatprep.subr.mxu0 0.0
      %1071 = vmatpush2.msra.mxu0 0.0
      %1072 = vmatprep.subr.mxu0 0.0
      %1073 = vmatpush2.msra.mxu0 0.0
      %1074 = vmatprep.subr.mxu0 0.0
      %1075 = vmatpush2.msra.mxu0 0.0
      %1076 = vmatprep.subr.mxu0 0.0
      %1077 = vmatpush2.msra.mxu0 0.0
      %1078 = vmatprep.subr.mxu0 0.0
      %1079 = vmatpush2.msra.mxu0 0.0
      %1080 = vmatprep.subr.mxu0 0.0
      %1081 = vmatpush2.msra.mxu0 0.0
      %1082 = vmatprep.subr.mxu0 0.0
      %1083 = vmatpush2.msra.mxu0 0.0
      %1084 = vmatprep.subr.mxu0 0.0
      %1085 = vmatpush2.msra.mxu0 0.0
      %1086 = vmatprep.subr.mxu0 0.0
      %1087 = vmatpush2.msra.mxu0 0.0
      %1088 = vmatprep.subr.mxu0 0.0
      %1089 = vmatpush2.msra.mxu0 0.0
      %1090 = vmatprep.subr.mxu0 0.0
      %1091 = vmatpush2.msra.mxu0 0.0
      %1092 = vmatprep.subr.mxu0 0.0
      %1093 = vmatpush2.msra.mxu0 0.0
      %1094 = vmatprep.subr.mxu0 0.0
      %1095 = vmatpush2.msra.mxu0 0.0
      %1096 = vmatprep.subr.mxu0 0.0
      %1097 = vmatpush2.msra.mxu0 0.0
      %1098 = vmatprep.mubr.f32.mxu0 0.0
      %v1099 = vand.u32 %v862, 4294901760
      %1100 = vmatmul.mubr.f32.gmra.mxu0 %v1099
      %v1101 = vpop.f32.mrf.mxu0
      %v1102 = vadd.f32 %v951, %v1101
      %v1103 = vpop.f32.mrf.mxu0
      %1104 = vdwg.mxu0
      %1105 = vmatprep.subr.mxu0 0.0
      %v1106 = vand.u32 %v219, 4294901760
      %v1107 = vsub.f32 %v219, %v1106
      %1108 = vmatpush1.msra.mxu0 %v1107
      %1109 = vmatprep.subr.mxu0 0.0
      %v1110 = vand.u32 %v218, 4294901760
      %v1111 = vsub.f32 %v218, %v1110
      %1112 = vmatpush1.msra.mxu0 %v1111
      %1113 = vmatprep.subr.mxu0 0.0
      %v1114 = vand.u32 %v217, 4294901760
      %v1115 = vsub.f32 %v217, %v1114
      %1116 = vmatpush1.msra.mxu0 %v1115
      %1117 = vmatprep.subr.mxu0 0.0
      %v1118 = vand.u32 %v216, 4294901760
      %v1119 = vsub.f32 %v216, %v1118
      %1120 = vmatpush1.msra.mxu0 %v1119
      %1121 = vmatprep.subr.mxu0 0.0
      %v1122 = vand.u32 %v215, 4294901760
      %v1123 = vsub.f32 %v215, %v1122
      %1124 = vmatpush1.msra.mxu0 %v1123
      %1125 = vmatprep.subr.mxu0 0.0
      %v1126 = vand.u32 %v214, 4294901760
      %v1127 = vsub.f32 %v214, %v1126
      %1128 = vmatpush1.msra.mxu0 %v1127
      %1129 = vmatprep.subr.mxu0 0.0
      %v1130 = vand.u32 %v213, 4294901760
      %v1131 = vsub.f32 %v213, %v1130
      %1132 = vmatpush1.msra.mxu0 %v1131
      %1133 = vmatprep.subr.mxu0 0.0
      %v1134 = vand.u32 %v212, 4294901760
      %v1135 = vsub.f32 %v212, %v1134
      %1136 = vmatpush1.msra.mxu0 %v1135
      %1137 = vmatprep.subr.mxu0 0.0
      %v1138 = vand.u32 %v211, 4294901760
      %v1139 = vsub.f32 %v211, %v1138
      %1140 = vmatpush1.msra.mxu0 %v1139
      %1141 = vmatprep.subr.mxu0 0.0
      %v1142 = vand.u32 %v210, 4294901760
      %v1143 = vsub.f32 %v210, %v1142
      %1144 = vmatpush1.msra.mxu0 %v1143
      %1145 = vmatprep.subr.mxu0 0.0
      %v1146 = vand.u32 %v209, 4294901760
      %v1147 = vsub.f32 %v209, %v1146
      %1148 = vmatpush1.msra.mxu0 %v1147
      %1149 = vmatprep.subr.mxu0 0.0
      %v1150 = vand.u32 %v208, 4294901760
      %v1151 = vsub.f32 %v208, %v1150
      %1152 = vmatpush1.msra.mxu0 %v1151
      %1153 = vmatprep.subr.mxu0 0.0
      %v1154 = vand.u32 %v207, 4294901760
      %v1155 = vsub.f32 %v207, %v1154
      %1156 = vmatpush1.msra.mxu0 %v1155
      %1157 = vmatprep.subr.mxu0 0.0
      %v1158 = vand.u32 %v206, 4294901760
      %v1159 = vsub.f32 %v206, %v1158
      %1160 = vmatpush1.msra.mxu0 %v1159
      %1161 = vmatprep.subr.mxu0 0.0
      %v1162 = vand.u32 %v205, 4294901760
      %v1163 = vsub.f32 %v205, %v1162
      %1164 = vmatpush1.msra.mxu0 %v1163
      %1165 = vmatprep.subr.mxu0 0.0
      %v1166 = vand.u32 %v204, 4294901760
      %v1167 = vsub.f32 %v204, %v1166
      %1168 = vmatpush1.msra.mxu0 %v1167
      %1169 = vmatprep.subr.mxu0 0.0
      %1170 = vmatpush2.msra.mxu0 0.0
      %1171 = vmatprep.subr.mxu0 0.0
      %1172 = vmatpush2.msra.mxu0 0.0
      %1173 = vmatprep.subr.mxu0 0.0
      %1174 = vmatpush2.msra.mxu0 0.0
      %1175 = vmatprep.subr.mxu0 0.0
      %1176 = vmatpush2.msra.mxu0 0.0
      %1177 = vmatprep.subr.mxu0 0.0
      %1178 = vmatpush2.msra.mxu0 0.0
      %1179 = vmatprep.subr.mxu0 0.0
      %1180 = vmatpush2.msra.mxu0 0.0
      %1181 = vmatprep.subr.mxu0 0.0
      %1182 = vmatpush2.msra.mxu0 0.0
      %1183 = vmatprep.subr.mxu0 0.0
      %1184 = vmatpush2.msra.mxu0 0.0
      %1185 = vmatprep.subr.mxu0 0.0
      %1186 = vmatpush2.msra.mxu0 0.0
      %1187 = vmatprep.subr.mxu0 0.0
      %1188 = vmatpush2.msra.mxu0 0.0
      %1189 = vmatprep.subr.mxu0 0.0
      %1190 = vmatpush2.msra.mxu0 0.0
      %1191 = vmatprep.subr.mxu0 0.0
      %1192 = vmatpush2.msra.mxu0 0.0
      %1193 = vmatprep.subr.mxu0 0.0
      %1194 = vmatpush2.msra.mxu0 0.0
      %1195 = vmatprep.subr.mxu0 0.0
      %1196 = vmatpush2.msra.mxu0 0.0
      %1197 = vmatprep.subr.mxu0 0.0
      %1198 = vmatpush2.msra.mxu0 0.0
      %1199 = vmatprep.subr.mxu0 0.0
      %1200 = vmatpush2.msra.mxu0 0.0
      %1201 = vmatprep.mubr.f32.mxu0 0.0
      %v1202 = vand.u32 %v862, 4294901760
      %v1203 = vsub.f32 %v862, %v1202
      %1204 = vmatmul.mubr.f32.gmra.mxu0 %v1203
      %v1205 = vpop.f32.mrf.mxu0
      %v1206 = vadd.f32 %v1102, %v1205
      %v1207 = vpop.f32.mrf.mxu0
      %1208 = vdwg.mxu0
      %1209 = vmatprep.subr.mxu0 0.0
      %v1210 = vand.u32 %v219, 4294901760
      %1211 = vmatpush1.msra.mxu0 %v1210
      %1212 = vmatprep.subr.mxu0 0.0
      %v1213 = vand.u32 %v218, 4294901760
      %1214 = vmatpush1.msra.mxu0 %v1213
      %1215 = vmatprep.subr.mxu0 0.0
      %v1216 = vand.u32 %v217, 4294901760
      %1217 = vmatpush1.msra.mxu0 %v1216
      %1218 = vmatprep.subr.mxu0 0.0
      %v1219 = vand.u32 %v216, 4294901760
      %1220 = vmatpush1.msra.mxu0 %v1219
      %1221 = vmatprep.subr.mxu0 0.0
      %v1222 = vand.u32 %v215, 4294901760
      %1223 = vmatpush1.msra.mxu0 %v1222
      %1224 = vmatprep.subr.mxu0 0.0
      %v1225 = vand.u32 %v214, 4294901760
      %1226 = vmatpush1.msra.mxu0 %v1225
      %1227 = vmatprep.subr.mxu0 0.0
      %v1228 = vand.u32 %v213, 4294901760
      %1229 = vmatpush1.msra.mxu0 %v1228
      %1230 = vmatprep.subr.mxu0 0.0
      %v1231 = vand.u32 %v212, 4294901760
      %1232 = vmatpush1.msra.mxu0 %v1231
      %1233 = vmatprep.subr.mxu0 0.0
      %v1234 = vand.u32 %v211, 4294901760
      %1235 = vmatpush1.msra.mxu0 %v1234
      %1236 = vmatprep.subr.mxu0 0.0
      %v1237 = vand.u32 %v210, 4294901760
      %1238 = vmatpush1.msra.mxu0 %v1237
      %1239 = vmatprep.subr.mxu0 0.0
      %v1240 = vand.u32 %v209, 4294901760
      %1241 = vmatpush1.msra.mxu0 %v1240
      %1242 = vmatprep.subr.mxu0 0.0
      %v1243 = vand.u32 %v208, 4294901760
      %1244 = vmatpush1.msra.mxu0 %v1243
      %1245 = vmatprep.subr.mxu0 0.0
      %v1246 = vand.u32 %v207, 4294901760
      %1247 = vmatpush1.msra.mxu0 %v1246
      %1248 = vmatprep.subr.mxu0 0.0
      %v1249 = vand.u32 %v206, 4294901760
      %1250 = vmatpush1.msra.mxu0 %v1249
      %1251 = vmatprep.subr.mxu0 0.0
      %v1252 = vand.u32 %v205, 4294901760
      %1253 = vmatpush1.msra.mxu0 %v1252
      %1254 = vmatprep.subr.mxu0 0.0
      %v1255 = vand.u32 %v204, 4294901760
      %1256 = vmatpush1.msra.mxu0 %v1255
      %1257 = vmatprep.subr.mxu0 0.0
      %1258 = vmatpush2.msra.mxu0 0.0
      %1259 = vmatprep.subr.mxu0 0.0
      %1260 = vmatpush2.msra.mxu0 0.0
      %1261 = vmatprep.subr.mxu0 0.0
      %1262 = vmatpush2.msra.mxu0 0.0
      %1263 = vmatprep.subr.mxu0 0.0
      %1264 = vmatpush2.msra.mxu0 0.0
      %1265 = vmatprep.subr.mxu0 0.0
      %1266 = vmatpush2.msra.mxu0 0.0
      %1267 = vmatprep.subr.mxu0 0.0
      %1268 = vmatpush2.msra.mxu0 0.0
      %1269 = vmatprep.subr.mxu0 0.0
      %1270 = vmatpush2.msra.mxu0 0.0
      %1271 = vmatprep.subr.mxu0 0.0
      %1272 = vmatpush2.msra.mxu0 0.0
      %1273 = vmatprep.subr.mxu0 0.0
      %1274 = vmatpush2.msra.mxu0 0.0
      %1275 = vmatprep.subr.mxu0 0.0
      %1276 = vmatpush2.msra.mxu0 0.0
      %1277 = vmatprep.subr.mxu0 0.0
      %1278 = vmatpush2.msra.mxu0 0.0
      %1279 = vmatprep.subr.mxu0 0.0
      %1280 = vmatpush2.msra.mxu0 0.0
      %1281 = vmatprep.subr.mxu0 0.0
      %1282 = vmatpush2.msra.mxu0 0.0
      %1283 = vmatprep.subr.mxu0 0.0
      %1284 = vmatpush2.msra.mxu0 0.0
      %1285 = vmatprep.subr.mxu0 0.0
      %1286 = vmatpush2.msra.mxu0 0.0
      %1287 = vmatprep.subr.mxu0 0.0
      %1288 = vmatpush2.msra.mxu0 0.0
      %1289 = vmatprep.mubr.f32.mxu0 0.0
      %v1290 = vand.u32 %v862, 4294901760
      %v1291 = vsub.f32 %v862, %v1290
      %v1292 = vand.u32 %v1291, 4294901760
      %1293 = vmatmul.mubr.f32.gmra.mxu0 %v1292
      %v1294 = vpop.f32.mrf.mxu0
      %v1295 = vadd.f32 %v1206, %v1294
      %v1296 = vpop.f32.mrf.mxu0
      %1297 = vdwg.mxu0
      %1298 = vmatprep.subr.mxu0 0.0
      %v1299 = vand.u32 %v219, 4294901760
      %v1300 = vsub.f32 %v219, %v1299
      %v1301 = vand.u32 %v1300, 4294901760
      %1302 = vmatpush1.msra.mxu0 %v1301
      %1303 = vmatprep.subr.mxu0 0.0
      %v1304 = vand.u32 %v218, 4294901760
      %v1305 = vsub.f32 %v218, %v1304
      %v1306 = vand.u32 %v1305, 4294901760
      %1307 = vmatpush1.msra.mxu0 %v1306
      %1308 = vmatprep.subr.mxu0 0.0
      %v1309 = vand.u32 %v217, 4294901760
      %v1310 = vsub.f32 %v217, %v1309
      %v1311 = vand.u32 %v1310, 4294901760
      %1312 = vmatpush1.msra.mxu0 %v1311
      %1313 = vmatprep.subr.mxu0 0.0
      %v1314 = vand.u32 %v216, 4294901760
      %v1315 = vsub.f32 %v216, %v1314
      %v1316 = vand.u32 %v1315, 4294901760
      %1317 = vmatpush1.msra.mxu0 %v1316
      %1318 = vmatprep.subr.mxu0 0.0
      %v1319 = vand.u32 %v215, 4294901760
      %v1320 = vsub.f32 %v215, %v1319
      %v1321 = vand.u32 %v1320, 4294901760
      %1322 = vmatpush1.msra.mxu0 %v1321
      %1323 = vmatprep.subr.mxu0 0.0
      %v1324 = vand.u32 %v214, 4294901760
      %v1325 = vsub.f32 %v214, %v1324
      %v1326 = vand.u32 %v1325, 4294901760
      %1327 = vmatpush1.msra.mxu0 %v1326
      %1328 = vmatprep.subr.mxu0 0.0
      %v1329 = vand.u32 %v213, 4294901760
      %v1330 = vsub.f32 %v213, %v1329
      %v1331 = vand.u32 %v1330, 4294901760
      %1332 = vmatpush1.msra.mxu0 %v1331
      %1333 = vmatprep.subr.mxu0 0.0
      %v1334 = vand.u32 %v212, 4294901760
      %v1335 = vsub.f32 %v212, %v1334
      %v1336 = vand.u32 %v1335, 4294901760
      %1337 = vmatpush1.msra.mxu0 %v1336
      %1338 = vmatprep.subr.mxu0 0.0
      %v1339 = vand.u32 %v211, 4294901760
      %v1340 = vsub.f32 %v211, %v1339
      %v1341 = vand.u32 %v1340, 4294901760
      %1342 = vmatpush1.msra.mxu0 %v1341
      %1343 = vmatprep.subr.mxu0 0.0
      %v1344 = vand.u32 %v210, 4294901760
      %v1345 = vsub.f32 %v210, %v1344
      %v1346 = vand.u32 %v1345, 4294901760
      %1347 = vmatpush1.msra.mxu0 %v1346
      %1348 = vmatprep.subr.mxu0 0.0
      %v1349 = vand.u32 %v209, 4294901760
      %v1350 = vsub.f32 %v209, %v1349
      %v1351 = vand.u32 %v1350, 4294901760
      %1352 = vmatpush1.msra.mxu0 %v1351
      %1353 = vmatprep.subr.mxu0 0.0
      %v1354 = vand.u32 %v208, 4294901760
      %v1355 = vsub.f32 %v208, %v1354
      %v1356 = vand.u32 %v1355, 4294901760
      %1357 = vmatpush1.msra.mxu0 %v1356
      %1358 = vmatprep.subr.mxu0 0.0
      %v1359 = vand.u32 %v207, 4294901760
      %v1360 = vsub.f32 %v207, %v1359
      %v1361 = vand.u32 %v1360, 4294901760
      %1362 = vmatpush1.msra.mxu0 %v1361
      %1363 = vmatprep.subr.mxu0 0.0
      %v1364 = vand.u32 %v206, 4294901760
      %v1365 = vsub.f32 %v206, %v1364
      %v1366 = vand.u32 %v1365, 4294901760
      %1367 = vmatpush1.msra.mxu0 %v1366
      %1368 = vmatprep.subr.mxu0 0.0
      %v1369 = vand.u32 %v205, 4294901760
      %v1370 = vsub.f32 %v205, %v1369
      %v1371 = vand.u32 %v1370, 4294901760
      %1372 = vmatpush1.msra.mxu0 %v1371
      %1373 = vmatprep.subr.mxu0 0.0
      %v1374 = vand.u32 %v204, 4294901760
      %v1375 = vsub.f32 %v204, %v1374
      %v1376 = vand.u32 %v1375, 4294901760
      %1377 = vmatpush1.msra.mxu0 %v1376
      %1378 = vmatprep.subr.mxu0 0.0
      %1379 = vmatpush2.msra.mxu0 0.0
      %1380 = vmatprep.subr.mxu0 0.0
      %1381 = vmatpush2.msra.mxu0 0.0
      %1382 = vmatprep.subr.mxu0 0.0
      %1383 = vmatpush2.msra.mxu0 0.0
      %1384 = vmatprep.subr.mxu0 0.0
      %1385 = vmatpush2.msra.mxu0 0.0
      %1386 = vmatprep.subr.mxu0 0.0
      %1387 = vmatpush2.msra.mxu0 0.0
      %1388 = vmatprep.subr.mxu0 0.0
      %1389 = vmatpush2.msra.mxu0 0.0
      %1390 = vmatprep.subr.mxu0 0.0
      %1391 = vmatpush2.msra.mxu0 0.0
      %1392 = vmatprep.subr.mxu0 0.0
      %1393 = vmatpush2.msra.mxu0 0.0
      %1394 = vmatprep.subr.mxu0 0.0
      %1395 = vmatpush2.msra.mxu0 0.0
      %1396 = vmatprep.subr.mxu0 0.0
      %1397 = vmatpush2.msra.mxu0 0.0
      %1398 = vmatprep.subr.mxu0 0.0
      %1399 = vmatpush2.msra.mxu0 0.0
      %1400 = vmatprep.subr.mxu0 0.0
      %1401 = vmatpush2.msra.mxu0 0.0
      %1402 = vmatprep.subr.mxu0 0.0
      %1403 = vmatpush2.msra.mxu0 0.0
      %1404 = vmatprep.subr.mxu0 0.0
      %1405 = vmatpush2.msra.mxu0 0.0
      %1406 = vmatprep.subr.mxu0 0.0
      %1407 = vmatpush2.msra.mxu0 0.0
      %1408 = vmatprep.subr.mxu0 0.0
      %1409 = vmatpush2.msra.mxu0 0.0
      %1410 = vmatprep.mubr.f32.mxu0 0.0
      %v1411 = vand.u32 %v862, 4294901760
      %1412 = vmatmul.mubr.f32.gmra.mxu0 %v1411
      %v1413 = vpop.f32.mrf.mxu0
      %v1414 = vadd.f32 %v1295, %v1413
      %v1415 = vpop.f32.mrf.mxu0
      %1416 = vdwg.mxu0
      %1417 = vmatprep.subr.mxu0 0.0
      %v1418 = vand.u32 %v219, 4294901760
      %1419 = vmatpush1.msra.mxu0 %v1418
      %1420 = vmatprep.subr.mxu0 0.0
      %v1421 = vand.u32 %v218, 4294901760
      %1422 = vmatpush1.msra.mxu0 %v1421
      %1423 = vmatprep.subr.mxu0 0.0
      %v1424 = vand.u32 %v217, 4294901760
      %1425 = vmatpush1.msra.mxu0 %v1424
      %1426 = vmatprep.subr.mxu0 0.0
      %v1427 = vand.u32 %v216, 4294901760
      %1428 = vmatpush1.msra.mxu0 %v1427
      %1429 = vmatprep.subr.mxu0 0.0
      %v1430 = vand.u32 %v215, 4294901760
      %1431 = vmatpush1.msra.mxu0 %v1430
      %1432 = vmatprep.subr.mxu0 0.0
      %v1433 = vand.u32 %v214, 4294901760
      %1434 = vmatpush1.msra.mxu0 %v1433
      %1435 = vmatprep.subr.mxu0 0.0
      %v1436 = vand.u32 %v213, 4294901760
      %1437 = vmatpush1.msra.mxu0 %v1436
      %1438 = vmatprep.subr.mxu0 0.0
      %v1439 = vand.u32 %v212, 4294901760
      %1440 = vmatpush1.msra.mxu0 %v1439
      %1441 = vmatprep.subr.mxu0 0.0
      %v1442 = vand.u32 %v211, 4294901760
      %1443 = vmatpush1.msra.mxu0 %v1442
      %1444 = vmatprep.subr.mxu0 0.0
      %v1445 = vand.u32 %v210, 4294901760
      %1446 = vmatpush1.msra.mxu0 %v1445
      %1447 = vmatprep.subr.mxu0 0.0
      %v1448 = vand.u32 %v209, 4294901760
      %1449 = vmatpush1.msra.mxu0 %v1448
      %1450 = vmatprep.subr.mxu0 0.0
      %v1451 = vand.u32 %v208, 4294901760
      %1452 = vmatpush1.msra.mxu0 %v1451
      %1453 = vmatprep.subr.mxu0 0.0
      %v1454 = vand.u32 %v207, 4294901760
      %1455 = vmatpush1.msra.mxu0 %v1454
      %1456 = vmatprep.subr.mxu0 0.0
      %v1457 = vand.u32 %v206, 4294901760
      %1458 = vmatpush1.msra.mxu0 %v1457
      %1459 = vmatprep.subr.mxu0 0.0
      %v1460 = vand.u32 %v205, 4294901760
      %1461 = vmatpush1.msra.mxu0 %v1460
      %1462 = vmatprep.subr.mxu0 0.0
      %v1463 = vand.u32 %v204, 4294901760
      %1464 = vmatpush1.msra.mxu0 %v1463
      %1465 = vmatprep.subr.mxu0 0.0
      %1466 = vmatpush2.msra.mxu0 0.0
      %1467 = vmatprep.subr.mxu0 0.0
      %1468 = vmatpush2.msra.mxu0 0.0
      %1469 = vmatprep.subr.mxu0 0.0
      %1470 = vmatpush2.msra.mxu0 0.0
      %1471 = vmatprep.subr.mxu0 0.0
      %1472 = vmatpush2.msra.mxu0 0.0
      %1473 = vmatprep.subr.mxu0 0.0
      %1474 = vmatpush2.msra.mxu0 0.0
      %1475 = vmatprep.subr.mxu0 0.0
      %1476 = vmatpush2.msra.mxu0 0.0
      %1477 = vmatprep.subr.mxu0 0.0
      %1478 = vmatpush2.msra.mxu0 0.0
      %1479 = vmatprep.subr.mxu0 0.0
      %1480 = vmatpush2.msra.mxu0 0.0
      %1481 = vmatprep.subr.mxu0 0.0
      %1482 = vmatpush2.msra.mxu0 0.0
      %1483 = vmatprep.subr.mxu0 0.0
      %1484 = vmatpush2.msra.mxu0 0.0
      %1485 = vmatprep.subr.mxu0 0.0
      %1486 = vmatpush2.msra.mxu0 0.0
      %1487 = vmatprep.subr.mxu0 0.0
      %1488 = vmatpush2.msra.mxu0 0.0
      %1489 = vmatprep.subr.mxu0 0.0
      %1490 = vmatpush2.msra.mxu0 0.0
      %1491 = vmatprep.subr.mxu0 0.0
      %1492 = vmatpush2.msra.mxu0 0.0
      %1493 = vmatprep.subr.mxu0 0.0
      %1494 = vmatpush2.msra.mxu0 0.0
      %1495 = vmatprep.subr.mxu0 0.0
      %1496 = vmatpush2.msra.mxu0 0.0
      %1497 = vmatprep.mubr.f32.mxu0 0.0
      %v1498 = vand.u32 %v862, 4294901760
      %1499 = vmatmul.mubr.f32.gmra.mxu0 %v1498
      %v1500 = vpop.f32.mrf.mxu0
      %v1501 = vadd.f32 %v1414, %v1500
      %v1502 = vpop.f32.mrf.mxu0
      %1503 = vdwg.mxu0
      %v1504 = vmul.f32 %v859, %v859
      %v1505 = vsub.f32 %v1501, %v1504
      %v1506 = vmax.f32 %v1505, 0.0
      %v1507 = vrsqrt.pop %v1506
      %v1508 = vmul.f32 %v1506, %v1507
      %vm1509 = vcmp.eq.f32.partialorder %v1506, inf
      %v1510 = vsel %vm1509, %v1506, %v1508
      %vm1511 = vcmp.eq.f32.partialorder %v1506, 0.0
      %v1512 = vand.u32 %v1506, 2147483648
      %v1513 = vsel %vm1511, %v1512, %v1510
      %v1514 = vadd.f32 %v1513, 1e-07
      %v1515 = vrcp.pop %v1514
      %v1516 = vmul.f32 %v1514, %v1515
      %v1517 = vsub.f32 2.0, %v1516
      %v1518 = vmul.f32 %v1515, %v1517
      %v1519 = vsub.f32 %v220, %v859
      %v1520 = vmul.f32 %v1519, %v1518
      %v1521 = vlaneseq
      %v1522 = vshrl.u32 %v1521, 7
      %v1523 = vsub.s32 0, %v1522
      %v1524 = vrot.slane %v202, %v1523
      %v1525 = vmul.f32 %v1520, %v1524
      %v1526 = vlaneseq
      %v1527 = vshrl.u32 %v1526, 7
      %v1528 = vsub.s32 0, %v1527
      %v1529 = vrot.slane %v203, %v1528
      %v1530 = vadd.f32 %v1525, %v1529
      %1531 = vst [vmem:[%s201] sm:$0x3] %v1530
      %s1532 = scalar_lea.vmem %s193, 2
      %v1533 = vld [vmem:[%s1532] sm:$0x3]
      %1534 = vmatprep.subr.mxu0 0.0
      %v1535 = vand.u32 %v219, 4294901760
      %1536 = vmatpush1.msra.mxu0 %v1535
      %1537 = vmatprep.subr.mxu0 0.0
      %v1538 = vand.u32 %v218, 4294901760
      %1539 = vmatpush1.msra.mxu0 %v1538
      %1540 = vmatprep.subr.mxu0 0.0
      %v1541 = vand.u32 %v217, 4294901760
      %1542 = vmatpush1.msra.mxu0 %v1541
      %1543 = vmatprep.subr.mxu0 0.0
      %v1544 = vand.u32 %v216, 4294901760
      %1545 = vmatpush1.msra.mxu0 %v1544
      %1546 = vmatprep.subr.mxu0 0.0
      %v1547 = vand.u32 %v215, 4294901760
      %1548 = vmatpush1.msra.mxu0 %v1547
      %1549 = vmatprep.subr.mxu0 0.0
      %v1550 = vand.u32 %v214, 4294901760
      %1551 = vmatpush1.msra.mxu0 %v1550
      %1552 = vmatprep.subr.mxu0 0.0
      %v1553 = vand.u32 %v213, 4294901760
      %1554 = vmatpush1.msra.mxu0 %v1553
      %1555 = vmatprep.subr.mxu0 0.0
      %v1556 = vand.u32 %v212, 4294901760
      %1557 = vmatpush1.msra.mxu0 %v1556
      %1558 = vmatprep.subr.mxu0 0.0
      %v1559 = vand.u32 %v211, 4294901760
      %1560 = vmatpush1.msra.mxu0 %v1559
      %1561 = vmatprep.subr.mxu0 0.0
      %v1562 = vand.u32 %v210, 4294901760
      %1563 = vmatpush1.msra.mxu0 %v1562
      %1564 = vmatprep.subr.mxu0 0.0
      %v1565 = vand.u32 %v209, 4294901760
      %1566 = vmatpush1.msra.mxu0 %v1565
      %1567 = vmatprep.subr.mxu0 0.0
      %v1568 = vand.u32 %v208, 4294901760
      %1569 = vmatpush1.msra.mxu0 %v1568
      %1570 = vmatprep.subr.mxu0 0.0
      %v1571 = vand.u32 %v207, 4294901760
      %1572 = vmatpush1.msra.mxu0 %v1571
      %1573 = vmatprep.subr.mxu0 0.0
      %v1574 = vand.u32 %v206, 4294901760
      %1575 = vmatpush1.msra.mxu0 %v1574
      %1576 = vmatprep.subr.mxu0 0.0
      %v1577 = vand.u32 %v205, 4294901760
      %1578 = vmatpush1.msra.mxu0 %v1577
      %1579 = vmatprep.subr.mxu0 0.0
      %v1580 = vand.u32 %v204, 4294901760
      %1581 = vmatpush1.msra.mxu0 %v1580
      %1582 = vmatprep.subr.mxu0 0.0
      %1583 = vmatpush2.msra.mxu0 0.0
      %1584 = vmatprep.subr.mxu0 0.0
      %1585 = vmatpush2.msra.mxu0 0.0
      %1586 = vmatprep.subr.mxu0 0.0
      %1587 = vmatpush2.msra.mxu0 0.0
      %1588 = vmatprep.subr.mxu0 0.0
      %1589 = vmatpush2.msra.mxu0 0.0
      %1590 = vmatprep.subr.mxu0 0.0
      %1591 = vmatpush2.msra.mxu0 0.0
      %1592 = vmatprep.subr.mxu0 0.0
      %1593 = vmatpush2.msra.mxu0 0.0
      %1594 = vmatprep.subr.mxu0 0.0
      %1595 = vmatpush2.msra.mxu0 0.0
      %1596 = vmatprep.subr.mxu0 0.0
      %1597 = vmatpush2.msra.mxu0 0.0
      %1598 = vmatprep.subr.mxu0 0.0
      %1599 = vmatpush2.msra.mxu0 0.0
      %1600 = vmatprep.subr.mxu0 0.0
      %1601 = vmatpush2.msra.mxu0 0.0
      %1602 = vmatprep.subr.mxu0 0.0
      %1603 = vmatpush2.msra.mxu0 0.0
      %1604 = vmatprep.subr.mxu0 0.0
      %1605 = vmatpush2.msra.mxu0 0.0
      %1606 = vmatprep.subr.mxu0 0.0
      %1607 = vmatpush2.msra.mxu0 0.0
      %1608 = vmatprep.subr.mxu0 0.0
      %1609 = vmatpush2.msra.mxu0 0.0
      %1610 = vmatprep.subr.mxu0 0.0
      %1611 = vmatpush2.msra.mxu0 0.0
      %1612 = vmatprep.subr.mxu0 0.0
      %1613 = vmatpush2.msra.mxu0 0.0
      %1614 = vmatprep.mubr.f32.mxu0 0.0
      %v1615 = vand.u32 %v1533, 4294901760
      %v1616 = vsub.f32 %v1533, %v1615
      %v1617 = vand.u32 %v1616, 4294901760
      %v1618 = vsub.f32 %v1616, %v1617
      %v1619 = vand.u32 %v1618, 4294901760
      %1620 = vmatmul.mubr.f32.gmra.mxu0 %v1619
      %v1621 = vpop.f32.mrf.mxu0
      %v1622 = vadd.f32 0.0, %v1621
      %v1623 = vpop.f32.mrf.mxu0
      %1624 = vdwg.mxu0
      %1625 = vmatprep.subr.mxu0 0.0
      %v1626 = vand.u32 %v219, 4294901760
      %v1627 = vsub.f32 %v219, %v1626
      %v1628 = vand.u32 %v1627, 4294901760
      %v1629 = vsub.f32 %v1627, %v1628
      %v1630 = vand.u32 %v1629, 4294901760
      %1631 = vmatpush1.msra.mxu0 %v1630
      %1632 = vmatprep.subr.mxu0 0.0
      %v1633 = vand.u32 %v218, 4294901760
      %v1634 = vsub.f32 %v218, %v1633
      %v1635 = vand.u32 %v1634, 4294901760
      %v1636 = vsub.f32 %v1634, %v1635
      %v1637 = vand.u32 %v1636, 4294901760
      %1638 = vmatpush1.msra.mxu0 %v1637
      %1639 = vmatprep.subr.mxu0 0.0
      %v1640 = vand.u32 %v217, 4294901760
      %v1641 = vsub.f32 %v217, %v1640
      %v1642 = vand.u32 %v1641, 4294901760
      %v1643 = vsub.f32 %v1641, %v1642
      %v1644 = vand.u32 %v1643, 4294901760
      %1645 = vmatpush1.msra.mxu0 %v1644
      %1646 = vmatprep.subr.mxu0 0.0
      %v1647 = vand.u32 %v216, 4294901760
      %v1648 = vsub.f32 %v216, %v1647
      %v1649 = vand.u32 %v1648, 4294901760
      %v1650 = vsub.f32 %v1648, %v1649
      %v1651 = vand.u32 %v1650, 4294901760
      %1652 = vmatpush1.msra.mxu0 %v1651
      %1653 = vmatprep.subr.mxu0 0.0
      %v1654 = vand.u32 %v215, 4294901760
      %v1655 = vsub.f32 %v215, %v1654
      %v1656 = vand.u32 %v1655, 4294901760
      %v1657 = vsub.f32 %v1655, %v1656
      %v1658 = vand.u32 %v1657, 4294901760
      %1659 = vmatpush1.msra.mxu0 %v1658
      %1660 = vmatprep.subr.mxu0 0.0
      %v1661 = vand.u32 %v214, 4294901760
      %v1662 = vsub.f32 %v214, %v1661
      %v1663 = vand.u32 %v1662, 4294901760
      %v1664 = vsub.f32 %v1662, %v1663
      %v1665 = vand.u32 %v1664, 4294901760
      %1666 = vmatpush1.msra.mxu0 %v1665
      %1667 = vmatprep.subr.mxu0 0.0
      %v1668 = vand.u32 %v213, 4294901760
      %v1669 = vsub.f32 %v213, %v1668
      %v1670 = vand.u32 %v1669, 4294901760
      %v1671 = vsub.f32 %v1669, %v1670
      %v1672 = vand.u32 %v1671, 4294901760
      %1673 = vmatpush1.msra.mxu0 %v1672
      %1674 = vmatprep.subr.mxu0 0.0
      %v1675 = vand.u32 %v212, 4294901760
      %v1676 = vsub.f32 %v212, %v1675
      %v1677 = vand.u32 %v1676, 4294901760
      %v1678 = vsub.f32 %v1676, %v1677
      %v1679 = vand.u32 %v1678, 4294901760
      %1680 = vmatpush1.msra.mxu0 %v1679
      %1681 = vmatprep.subr.mxu0 0.0
      %v1682 = vand.u32 %v211, 4294901760
      %v1683 = vsub.f32 %v211, %v1682
      %v1684 = vand.u32 %v1683, 4294901760
      %v1685 = vsub.f32 %v1683, %v1684
      %v1686 = vand.u32 %v1685, 4294901760
      %1687 = vmatpush1.msra.mxu0 %v1686
      %1688 = vmatprep.subr.mxu0 0.0
      %v1689 = vand.u32 %v210, 4294901760
      %v1690 = vsub.f32 %v210, %v1689
      %v1691 = vand.u32 %v1690, 4294901760
      %v1692 = vsub.f32 %v1690, %v1691
      %v1693 = vand.u32 %v1692, 4294901760
      %1694 = vmatpush1.msra.mxu0 %v1693
      %1695 = vmatprep.subr.mxu0 0.0
      %v1696 = vand.u32 %v209, 4294901760
      %v1697 = vsub.f32 %v209, %v1696
      %v1698 = vand.u32 %v1697, 4294901760
      %v1699 = vsub.f32 %v1697, %v1698
      %v1700 = vand.u32 %v1699, 4294901760
      %1701 = vmatpush1.msra.mxu0 %v1700
      %1702 = vmatprep.subr.mxu0 0.0
      %v1703 = vand.u32 %v208, 4294901760
      %v1704 = vsub.f32 %v208, %v1703
      %v1705 = vand.u32 %v1704, 4294901760
      %v1706 = vsub.f32 %v1704, %v1705
      %v1707 = vand.u32 %v1706, 4294901760
      %1708 = vmatpush1.msra.mxu0 %v1707
      %1709 = vmatprep.subr.mxu0 0.0
      %v1710 = vand.u32 %v207, 4294901760
      %v1711 = vsub.f32 %v207, %v1710
      %v1712 = vand.u32 %v1711, 4294901760
      %v1713 = vsub.f32 %v1711, %v1712
      %v1714 = vand.u32 %v1713, 4294901760
      %1715 = vmatpush1.msra.mxu0 %v1714
      %1716 = vmatprep.subr.mxu0 0.0
      %v1717 = vand.u32 %v206, 4294901760
      %v1718 = vsub.f32 %v206, %v1717
      %v1719 = vand.u32 %v1718, 4294901760
      %v1720 = vsub.f32 %v1718, %v1719
      %v1721 = vand.u32 %v1720, 4294901760
      %1722 = vmatpush1.msra.mxu0 %v1721
      %1723 = vmatprep.subr.mxu0 0.0
      %v1724 = vand.u32 %v205, 4294901760
      %v1725 = vsub.f32 %v205, %v1724
      %v1726 = vand.u32 %v1725, 4294901760
      %v1727 = vsub.f32 %v1725, %v1726
      %v1728 = vand.u32 %v1727, 4294901760
      %1729 = vmatpush1.msra.mxu0 %v1728
      %1730 = vmatprep.subr.mxu0 0.0
      %v1731 = vand.u32 %v204, 4294901760
      %v1732 = vsub.f32 %v204, %v1731
      %v1733 = vand.u32 %v1732, 4294901760
      %v1734 = vsub.f32 %v1732, %v1733
      %v1735 = vand.u32 %v1734, 4294901760
      %1736 = vmatpush1.msra.mxu0 %v1735
      %1737 = vmatprep.subr.mxu0 0.0
      %1738 = vmatpush2.msra.mxu0 0.0
      %1739 = vmatprep.subr.mxu0 0.0
      %1740 = vmatpush2.msra.mxu0 0.0
      %1741 = vmatprep.subr.mxu0 0.0
      %1742 = vmatpush2.msra.mxu0 0.0
      %1743 = vmatprep.subr.mxu0 0.0
      %1744 = vmatpush2.msra.mxu0 0.0
      %1745 = vmatprep.subr.mxu0 0.0
      %1746 = vmatpush2.msra.mxu0 0.0
      %1747 = vmatprep.subr.mxu0 0.0
      %1748 = vmatpush2.msra.mxu0 0.0
      %1749 = vmatprep.subr.mxu0 0.0
      %1750 = vmatpush2.msra.mxu0 0.0
      %1751 = vmatprep.subr.mxu0 0.0
      %1752 = vmatpush2.msra.mxu0 0.0
      %1753 = vmatprep.subr.mxu0 0.0
      %1754 = vmatpush2.msra.mxu0 0.0
      %1755 = vmatprep.subr.mxu0 0.0
      %1756 = vmatpush2.msra.mxu0 0.0
      %1757 = vmatprep.subr.mxu0 0.0
      %1758 = vmatpush2.msra.mxu0 0.0
      %1759 = vmatprep.subr.mxu0 0.0
      %1760 = vmatpush2.msra.mxu0 0.0
      %1761 = vmatprep.subr.mxu0 0.0
      %1762 = vmatpush2.msra.mxu0 0.0
      %1763 = vmatprep.subr.mxu0 0.0
      %1764 = vmatpush2.msra.mxu0 0.0
      %1765 = vmatprep.subr.mxu0 0.0
      %1766 = vmatpush2.msra.mxu0 0.0
      %1767 = vmatprep.subr.mxu0 0.0
      %1768 = vmatpush2.msra.mxu0 0.0
      %1769 = vmatprep.mubr.f32.mxu0 0.0
      %v1770 = vand.u32 %v1533, 4294901760
      %1771 = vmatmul.mubr.f32.gmra.mxu0 %v1770
      %v1772 = vpop.f32.mrf.mxu0
      %v1773 = vadd.f32 %v1622, %v1772
      %v1774 = vpop.f32.mrf.mxu0
      %1775 = vdwg.mxu0
      %1776 = vmatprep.subr.mxu0 0.0
      %v1777 = vand.u32 %v219, 4294901760
      %v1778 = vsub.f32 %v219, %v1777
      %1779 = vmatpush1.msra.mxu0 %v1778
      %1780 = vmatprep.subr.mxu0 0.0
      %v1781 = vand.u32 %v218, 4294901760
      %v1782 = vsub.f32 %v218, %v1781
      %1783 = vmatpush1.msra.mxu0 %v1782
      %1784 = vmatprep.subr.mxu0 0.0
      %v1785 = vand.u32 %v217, 4294901760
      %v1786 = vsub.f32 %v217, %v1785
      %1787 = vmatpush1.msra.mxu0 %v1786
      %1788 = vmatprep.subr.mxu0 0.0
      %v1789 = vand.u32 %v216, 4294901760
      %v1790 = vsub.f32 %v216, %v1789
      %1791 = vmatpush1.msra.mxu0 %v1790
      %1792 = vmatprep.subr.mxu0 0.0
      %v1793 = vand.u32 %v215, 4294901760
      %v1794 = vsub.f32 %v215, %v1793
      %1795 = vmatpush1.msra.mxu0 %v1794
      %1796 = vmatprep.subr.mxu0 0.0
      %v1797 = vand.u32 %v214, 4294901760
      %v1798 = vsub.f32 %v214, %v1797
      %1799 = vmatpush1.msra.mxu0 %v1798
      %1800 = vmatprep.subr.mxu0 0.0
      %v1801 = vand.u32 %v213, 4294901760
      %v1802 = vsub.f32 %v213, %v1801
      %1803 = vmatpush1.msra.mxu0 %v1802
      %1804 = vmatprep.subr.mxu0 0.0
      %v1805 = vand.u32 %v212, 4294901760
      %v1806 = vsub.f32 %v212, %v1805
      %1807 = vmatpush1.msra.mxu0 %v1806
      %1808 = vmatprep.subr.mxu0 0.0
      %v1809 = vand.u32 %v211, 4294901760
      %v1810 = vsub.f32 %v211, %v1809
      %1811 = vmatpush1.msra.mxu0 %v1810
      %1812 = vmatprep.subr.mxu0 0.0
      %v1813 = vand.u32 %v210, 4294901760
      %v1814 = vsub.f32 %v210, %v1813
      %1815 = vmatpush1.msra.mxu0 %v1814
      %1816 = vmatprep.subr.mxu0 0.0
      %v1817 = vand.u32 %v209, 4294901760
      %v1818 = vsub.f32 %v209, %v1817
      %1819 = vmatpush1.msra.mxu0 %v1818
      %1820 = vmatprep.subr.mxu0 0.0
      %v1821 = vand.u32 %v208, 4294901760
      %v1822 = vsub.f32 %v208, %v1821
      %1823 = vmatpush1.msra.mxu0 %v1822
      %1824 = vmatprep.subr.mxu0 0.0
      %v1825 = vand.u32 %v207, 4294901760
      %v1826 = vsub.f32 %v207, %v1825
      %1827 = vmatpush1.msra.mxu0 %v1826
      %1828 = vmatprep.subr.mxu0 0.0
      %v1829 = vand.u32 %v206, 4294901760
      %v1830 = vsub.f32 %v206, %v1829
      %1831 = vmatpush1.msra.mxu0 %v1830
      %1832 = vmatprep.subr.mxu0 0.0
      %v1833 = vand.u32 %v205, 4294901760
      %v1834 = vsub.f32 %v205, %v1833
      %1835 = vmatpush1.msra.mxu0 %v1834
      %1836 = vmatprep.subr.mxu0 0.0
      %v1837 = vand.u32 %v204, 4294901760
      %v1838 = vsub.f32 %v204, %v1837
      %1839 = vmatpush1.msra.mxu0 %v1838
      %1840 = vmatprep.subr.mxu0 0.0
      %1841 = vmatpush2.msra.mxu0 0.0
      %1842 = vmatprep.subr.mxu0 0.0
      %1843 = vmatpush2.msra.mxu0 0.0
      %1844 = vmatprep.subr.mxu0 0.0
      %1845 = vmatpush2.msra.mxu0 0.0
      %1846 = vmatprep.subr.mxu0 0.0
      %1847 = vmatpush2.msra.mxu0 0.0
      %1848 = vmatprep.subr.mxu0 0.0
      %1849 = vmatpush2.msra.mxu0 0.0
      %1850 = vmatprep.subr.mxu0 0.0
      %1851 = vmatpush2.msra.mxu0 0.0
      %1852 = vmatprep.subr.mxu0 0.0
      %1853 = vmatpush2.msra.mxu0 0.0
      %1854 = vmatprep.subr.mxu0 0.0
      %1855 = vmatpush2.msra.mxu0 0.0
      %1856 = vmatprep.subr.mxu0 0.0
      %1857 = vmatpush2.msra.mxu0 0.0
      %1858 = vmatprep.subr.mxu0 0.0
      %1859 = vmatpush2.msra.mxu0 0.0
      %1860 = vmatprep.subr.mxu0 0.0
      %1861 = vmatpush2.msra.mxu0 0.0
      %1862 = vmatprep.subr.mxu0 0.0
      %1863 = vmatpush2.msra.mxu0 0.0
      %1864 = vmatprep.subr.mxu0 0.0
      %1865 = vmatpush2.msra.mxu0 0.0
      %1866 = vmatprep.subr.mxu0 0.0
      %1867 = vmatpush2.msra.mxu0 0.0
      %1868 = vmatprep.subr.mxu0 0.0
      %1869 = vmatpush2.msra.mxu0 0.0
      %1870 = vmatprep.subr.mxu0 0.0
      %1871 = vmatpush2.msra.mxu0 0.0
      %1872 = vmatprep.mubr.f32.mxu0 0.0
      %v1873 = vand.u32 %v1533, 4294901760
      %v1874 = vsub.f32 %v1533, %v1873
      %1875 = vmatmul.mubr.f32.gmra.mxu0 %v1874
      %v1876 = vpop.f32.mrf.mxu0
      %v1877 = vadd.f32 %v1773, %v1876
      %v1878 = vpop.f32.mrf.mxu0
      %1879 = vdwg.mxu0
      %1880 = vmatprep.subr.mxu0 0.0
      %v1881 = vand.u32 %v219, 4294901760
      %1882 = vmatpush1.msra.mxu0 %v1881
      %1883 = vmatprep.subr.mxu0 0.0
      %v1884 = vand.u32 %v218, 4294901760
      %1885 = vmatpush1.msra.mxu0 %v1884
      %1886 = vmatprep.subr.mxu0 0.0
      %v1887 = vand.u32 %v217, 4294901760
      %1888 = vmatpush1.msra.mxu0 %v1887
      %1889 = vmatprep.subr.mxu0 0.0
      %v1890 = vand.u32 %v216, 4294901760
      %1891 = vmatpush1.msra.mxu0 %v1890
      %1892 = vmatprep.subr.mxu0 0.0
      %v1893 = vand.u32 %v215, 4294901760
      %1894 = vmatpush1.msra.mxu0 %v1893
      %1895 = vmatprep.subr.mxu0 0.0
      %v1896 = vand.u32 %v214, 4294901760
      %1897 = vmatpush1.msra.mxu0 %v1896
      %1898 = vmatprep.subr.mxu0 0.0
      %v1899 = vand.u32 %v213, 4294901760
      %1900 = vmatpush1.msra.mxu0 %v1899
      %1901 = vmatprep.subr.mxu0 0.0
      %v1902 = vand.u32 %v212, 4294901760
      %1903 = vmatpush1.msra.mxu0 %v1902
      %1904 = vmatprep.subr.mxu0 0.0
      %v1905 = vand.u32 %v211, 4294901760
      %1906 = vmatpush1.msra.mxu0 %v1905
      %1907 = vmatprep.subr.mxu0 0.0
      %v1908 = vand.u32 %v210, 4294901760
      %1909 = vmatpush1.msra.mxu0 %v1908
      %1910 = vmatprep.subr.mxu0 0.0
      %v1911 = vand.u32 %v209, 4294901760
      %1912 = vmatpush1.msra.mxu0 %v1911
      %1913 = vmatprep.subr.mxu0 0.0
      %v1914 = vand.u32 %v208, 4294901760
      %1915 = vmatpush1.msra.mxu0 %v1914
      %1916 = vmatprep.subr.mxu0 0.0
      %v1917 = vand.u32 %v207, 4294901760
      %1918 = vmatpush1.msra.mxu0 %v1917
      %1919 = vmatprep.subr.mxu0 0.0
      %v1920 = vand.u32 %v206, 4294901760
      %1921 = vmatpush1.msra.mxu0 %v1920
      %1922 = vmatprep.subr.mxu0 0.0
      %v1923 = vand.u32 %v205, 4294901760
      %1924 = vmatpush1.msra.mxu0 %v1923
      %1925 = vmatprep.subr.mxu0 0.0
      %v1926 = vand.u32 %v204, 4294901760
      %1927 = vmatpush1.msra.mxu0 %v1926
      %1928 = vmatprep.subr.mxu0 0.0
      %1929 = vmatpush2.msra.mxu0 0.0
      %1930 = vmatprep.subr.mxu0 0.0
      %1931 = vmatpush2.msra.mxu0 0.0
      %1932 = vmatprep.subr.mxu0 0.0
      %1933 = vmatpush2.msra.mxu0 0.0
      %1934 = vmatprep.subr.mxu0 0.0
      %1935 = vmatpush2.msra.mxu0 0.0
      %1936 = vmatprep.subr.mxu0 0.0
      %1937 = vmatpush2.msra.mxu0 0.0
      %1938 = vmatprep.subr.mxu0 0.0
      %1939 = vmatpush2.msra.mxu0 0.0
      %1940 = vmatprep.subr.mxu0 0.0
      %1941 = vmatpush2.msra.mxu0 0.0
      %1942 = vmatprep.subr.mxu0 0.0
      %1943 = vmatpush2.msra.mxu0 0.0
      %1944 = vmatprep.subr.mxu0 0.0
      %1945 = vmatpush2.msra.mxu0 0.0
      %1946 = vmatprep.subr.mxu0 0.0
      %1947 = vmatpush2.msra.mxu0 0.0
      %1948 = vmatprep.subr.mxu0 0.0
      %1949 = vmatpush2.msra.mxu0 0.0
      %1950 = vmatprep.subr.mxu0 0.0
      %1951 = vmatpush2.msra.mxu0 0.0
      %1952 = vmatprep.subr.mxu0 0.0
      %1953 = vmatpush2.msra.mxu0 0.0
      %1954 = vmatprep.subr.mxu0 0.0
      %1955 = vmatpush2.msra.mxu0 0.0
      %1956 = vmatprep.subr.mxu0 0.0
      %1957 = vmatpush2.msra.mxu0 0.0
      %1958 = vmatprep.subr.mxu0 0.0
      %1959 = vmatpush2.msra.mxu0 0.0
      %1960 = vmatprep.mubr.f32.mxu0 0.0
      %v1961 = vand.u32 %v1533, 4294901760
      %v1962 = vsub.f32 %v1533, %v1961
      %v1963 = vand.u32 %v1962, 4294901760
      %1964 = vmatmul.mubr.f32.gmra.mxu0 %v1963
      %v1965 = vpop.f32.mrf.mxu0
      %v1966 = vadd.f32 %v1877, %v1965
      %v1967 = vpop.f32.mrf.mxu0
      %1968 = vdwg.mxu0
      %1969 = vmatprep.subr.mxu0 0.0
      %v1970 = vand.u32 %v219, 4294901760
      %v1971 = vsub.f32 %v219, %v1970
      %v1972 = vand.u32 %v1971, 4294901760
      %1973 = vmatpush1.msra.mxu0 %v1972
      %1974 = vmatprep.subr.mxu0 0.0
      %v1975 = vand.u32 %v218, 4294901760
      %v1976 = vsub.f32 %v218, %v1975
      %v1977 = vand.u32 %v1976, 4294901760
      %1978 = vmatpush1.msra.mxu0 %v1977
      %1979 = vmatprep.subr.mxu0 0.0
      %v1980 = vand.u32 %v217, 4294901760
      %v1981 = vsub.f32 %v217, %v1980
      %v1982 = vand.u32 %v1981, 4294901760
      %1983 = vmatpush1.msra.mxu0 %v1982
      %1984 = vmatprep.subr.mxu0 0.0
      %v1985 = vand.u32 %v216, 4294901760
      %v1986 = vsub.f32 %v216, %v1985
      %v1987 = vand.u32 %v1986, 4294901760
      %1988 = vmatpush1.msra.mxu0 %v1987
      %1989 = vmatprep.subr.mxu0 0.0
      %v1990 = vand.u32 %v215, 4294901760
      %v1991 = vsub.f32 %v215, %v1990
      %v1992 = vand.u32 %v1991, 4294901760
      %1993 = vmatpush1.msra.mxu0 %v1992
      %1994 = vmatprep.subr.mxu0 0.0
      %v1995 = vand.u32 %v214, 4294901760
      %v1996 = vsub.f32 %v214, %v1995
      %v1997 = vand.u32 %v1996, 4294901760
      %1998 = vmatpush1.msra.mxu0 %v1997
      %1999 = vmatprep.subr.mxu0 0.0
      %v2000 = vand.u32 %v213, 4294901760
      %v2001 = vsub.f32 %v213, %v2000
      %v2002 = vand.u32 %v2001, 4294901760
      %2003 = vmatpush1.msra.mxu0 %v2002
      %2004 = vmatprep.subr.mxu0 0.0
      %v2005 = vand.u32 %v212, 4294901760
      %v2006 = vsub.f32 %v212, %v2005
      %v2007 = vand.u32 %v2006, 4294901760
      %2008 = vmatpush1.msra.mxu0 %v2007
      %2009 = vmatprep.subr.mxu0 0.0
      %v2010 = vand.u32 %v211, 4294901760
      %v2011 = vsub.f32 %v211, %v2010
      %v2012 = vand.u32 %v2011, 4294901760
      %2013 = vmatpush1.msra.mxu0 %v2012
      %2014 = vmatprep.subr.mxu0 0.0
      %v2015 = vand.u32 %v210, 4294901760
      %v2016 = vsub.f32 %v210, %v2015
      %v2017 = vand.u32 %v2016, 4294901760
      %2018 = vmatpush1.msra.mxu0 %v2017
      %2019 = vmatprep.subr.mxu0 0.0
      %v2020 = vand.u32 %v209, 4294901760
      %v2021 = vsub.f32 %v209, %v2020
      %v2022 = vand.u32 %v2021, 4294901760
      %2023 = vmatpush1.msra.mxu0 %v2022
      %2024 = vmatprep.subr.mxu0 0.0
      %v2025 = vand.u32 %v208, 4294901760
      %v2026 = vsub.f32 %v208, %v2025
      %v2027 = vand.u32 %v2026, 4294901760
      %2028 = vmatpush1.msra.mxu0 %v2027
      %2029 = vmatprep.subr.mxu0 0.0
      %v2030 = vand.u32 %v207, 4294901760
      %v2031 = vsub.f32 %v207, %v2030
      %v2032 = vand.u32 %v2031, 4294901760
      %2033 = vmatpush1.msra.mxu0 %v2032
      %2034 = vmatprep.subr.mxu0 0.0
      %v2035 = vand.u32 %v206, 4294901760
      %v2036 = vsub.f32 %v206, %v2035
      %v2037 = vand.u32 %v2036, 4294901760
      %2038 = vmatpush1.msra.mxu0 %v2037
      %2039 = vmatprep.subr.mxu0 0.0
      %v2040 = vand.u32 %v205, 4294901760
      %v2041 = vsub.f32 %v205, %v2040
      %v2042 = vand.u32 %v2041, 4294901760
      %2043 = vmatpush1.msra.mxu0 %v2042
      %2044 = vmatprep.subr.mxu0 0.0
      %v2045 = vand.u32 %v204, 4294901760
      %v2046 = vsub.f32 %v204, %v2045
      %v2047 = vand.u32 %v2046, 4294901760
      %2048 = vmatpush1.msra.mxu0 %v2047
      %2049 = vmatprep.subr.mxu0 0.0
      %2050 = vmatpush2.msra.mxu0 0.0
      %2051 = vmatprep.subr.mxu0 0.0
      %2052 = vmatpush2.msra.mxu0 0.0
      %2053 = vmatprep.subr.mxu0 0.0
      %2054 = vmatpush2.msra.mxu0 0.0
      %2055 = vmatprep.subr.mxu0 0.0
      %2056 = vmatpush2.msra.mxu0 0.0
      %2057 = vmatprep.subr.mxu0 0.0
      %2058 = vmatpush2.msra.mxu0 0.0
      %2059 = vmatprep.subr.mxu0 0.0
      %2060 = vmatpush2.msra.mxu0 0.0
      %2061 = vmatprep.subr.mxu0 0.0
      %2062 = vmatpush2.msra.mxu0 0.0
      %2063 = vmatprep.subr.mxu0 0.0
      %2064 = vmatpush2.msra.mxu0 0.0
      %2065 = vmatprep.subr.mxu0 0.0
      %2066 = vmatpush2.msra.mxu0 0.0
      %2067 = vmatprep.subr.mxu0 0.0
      %2068 = vmatpush2.msra.mxu0 0.0
      %2069 = vmatprep.subr.mxu0 0.0
      %2070 = vmatpush2.msra.mxu0 0.0
      %2071 = vmatprep.subr.mxu0 0.0
      %2072 = vmatpush2.msra.mxu0 0.0
      %2073 = vmatprep.subr.mxu0 0.0
      %2074 = vmatpush2.msra.mxu0 0.0
      %2075 = vmatprep.subr.mxu0 0.0
      %2076 = vmatpush2.msra.mxu0 0.0
      %2077 = vmatprep.subr.mxu0 0.0
      %2078 = vmatpush2.msra.mxu0 0.0
      %2079 = vmatprep.subr.mxu0 0.0
      %2080 = vmatpush2.msra.mxu0 0.0
      %2081 = vmatprep.mubr.f32.mxu0 0.0
      %v2082 = vand.u32 %v1533, 4294901760
      %2083 = vmatmul.mubr.f32.gmra.mxu0 %v2082
      %v2084 = vpop.f32.mrf.mxu0
      %v2085 = vadd.f32 %v1966, %v2084
      %v2086 = vpop.f32.mrf.mxu0
      %2087 = vdwg.mxu0
      %2088 = vmatprep.subr.mxu0 0.0
      %v2089 = vand.u32 %v219, 4294901760
      %2090 = vmatpush1.msra.mxu0 %v2089
      %2091 = vmatprep.subr.mxu0 0.0
      %v2092 = vand.u32 %v218, 4294901760
      %2093 = vmatpush1.msra.mxu0 %v2092
      %2094 = vmatprep.subr.mxu0 0.0
      %v2095 = vand.u32 %v217, 4294901760
      %2096 = vmatpush1.msra.mxu0 %v2095
      %2097 = vmatprep.subr.mxu0 0.0
      %v2098 = vand.u32 %v216, 4294901760
      %2099 = vmatpush1.msra.mxu0 %v2098
      %2100 = vmatprep.subr.mxu0 0.0
      %v2101 = vand.u32 %v215, 4294901760
      %2102 = vmatpush1.msra.mxu0 %v2101
      %2103 = vmatprep.subr.mxu0 0.0
      %v2104 = vand.u32 %v214, 4294901760
      %2105 = vmatpush1.msra.mxu0 %v2104
      %2106 = vmatprep.subr.mxu0 0.0
      %v2107 = vand.u32 %v213, 4294901760
      %2108 = vmatpush1.msra.mxu0 %v2107
      %2109 = vmatprep.subr.mxu0 0.0
      %v2110 = vand.u32 %v212, 4294901760
      %2111 = vmatpush1.msra.mxu0 %v2110
      %2112 = vmatprep.subr.mxu0 0.0
      %v2113 = vand.u32 %v211, 4294901760
      %2114 = vmatpush1.msra.mxu0 %v2113
      %2115 = vmatprep.subr.mxu0 0.0
      %v2116 = vand.u32 %v210, 4294901760
      %2117 = vmatpush1.msra.mxu0 %v2116
      %2118 = vmatprep.subr.mxu0 0.0
      %v2119 = vand.u32 %v209, 4294901760
      %2120 = vmatpush1.msra.mxu0 %v2119
      %2121 = vmatprep.subr.mxu0 0.0
      %v2122 = vand.u32 %v208, 4294901760
      %2123 = vmatpush1.msra.mxu0 %v2122
      %2124 = vmatprep.subr.mxu0 0.0
      %v2125 = vand.u32 %v207, 4294901760
      %2126 = vmatpush1.msra.mxu0 %v2125
      %2127 = vmatprep.subr.mxu0 0.0
      %v2128 = vand.u32 %v206, 4294901760
      %2129 = vmatpush1.msra.mxu0 %v2128
      %2130 = vmatprep.subr.mxu0 0.0
      %v2131 = vand.u32 %v205, 4294901760
      %2132 = vmatpush1.msra.mxu0 %v2131
      %2133 = vmatprep.subr.mxu0 0.0
      %v2134 = vand.u32 %v204, 4294901760
      %2135 = vmatpush1.msra.mxu0 %v2134
      %2136 = vmatprep.subr.mxu0 0.0
      %2137 = vmatpush2.msra.mxu0 0.0
      %2138 = vmatprep.subr.mxu0 0.0
      %2139 = vmatpush2.msra.mxu0 0.0
      %2140 = vmatprep.subr.mxu0 0.0
      %2141 = vmatpush2.msra.mxu0 0.0
      %2142 = vmatprep.subr.mxu0 0.0
      %2143 = vmatpush2.msra.mxu0 0.0
      %2144 = vmatprep.subr.mxu0 0.0
      %2145 = vmatpush2.msra.mxu0 0.0
      %2146 = vmatprep.subr.mxu0 0.0
      %2147 = vmatpush2.msra.mxu0 0.0
      %2148 = vmatprep.subr.mxu0 0.0
      %2149 = vmatpush2.msra.mxu0 0.0
      %2150 = vmatprep.subr.mxu0 0.0
      %2151 = vmatpush2.msra.mxu0 0.0
      %2152 = vmatprep.subr.mxu0 0.0
      %2153 = vmatpush2.msra.mxu0 0.0
      %2154 = vmatprep.subr.mxu0 0.0
      %2155 = vmatpush2.msra.mxu0 0.0
      %2156 = vmatprep.subr.mxu0 0.0
      %2157 = vmatpush2.msra.mxu0 0.0
      %2158 = vmatprep.subr.mxu0 0.0
      %2159 = vmatpush2.msra.mxu0 0.0
      %2160 = vmatprep.subr.mxu0 0.0
      %2161 = vmatpush2.msra.mxu0 0.0
      %2162 = vmatprep.subr.mxu0 0.0
      %2163 = vmatpush2.msra.mxu0 0.0
      %2164 = vmatprep.subr.mxu0 0.0
      %2165 = vmatpush2.msra.mxu0 0.0
      %2166 = vmatprep.subr.mxu0 0.0
      %2167 = vmatpush2.msra.mxu0 0.0
      %2168 = vmatprep.mubr.f32.mxu0 0.0
      %v2169 = vand.u32 %v1533, 4294901760
      %2170 = vmatmul.mubr.f32.gmra.mxu0 %v2169
      %v2171 = vpop.f32.mrf.mxu0
      %v2172 = vadd.f32 %v2085, %v2171
      %v2173 = vpop.f32.mrf.mxu0
      %2174 = vdwg.mxu0
      %v2175 = vmul.f32 %v1533, %v1533
      %2176 = vmatprep.subr.mxu0 0.0
      %v2177 = vand.u32 %v219, 4294901760
      %2178 = vmatpush1.msra.mxu0 %v2177
      %2179 = vmatprep.subr.mxu0 0.0
      %v2180 = vand.u32 %v218, 4294901760
      %2181 = vmatpush1.msra.mxu0 %v2180
      %2182 = vmatprep.subr.mxu0 0.0
      %v2183 = vand.u32 %v217, 4294901760
      %2184 = vmatpush1.msra.mxu0 %v2183
      %2185 = vmatprep.subr.mxu0 0.0
      %v2186 = vand.u32 %v216, 4294901760
      %2187 = vmatpush1.msra.mxu0 %v2186
      %2188 = vmatprep.subr.mxu0 0.0
      %v2189 = vand.u32 %v215, 4294901760
      %2190 = vmatpush1.msra.mxu0 %v2189
      %2191 = vmatprep.subr.mxu0 0.0
      %v2192 = vand.u32 %v214, 4294901760
      %2193 = vmatpush1.msra.mxu0 %v2192
      %2194 = vmatprep.subr.mxu0 0.0
      %v2195 = vand.u32 %v213, 4294901760
      %2196 = vmatpush1.msra.mxu0 %v2195
      %2197 = vmatprep.subr.mxu0 0.0
      %v2198 = vand.u32 %v212, 4294901760
      %2199 = vmatpush1.msra.mxu0 %v2198
      %2200 = vmatprep.subr.mxu0 0.0
      %v2201 = vand.u32 %v211, 4294901760
      %2202 = vmatpush1.msra.mxu0 %v2201
      %2203 = vmatprep.subr.mxu0 0.0
      %v2204 = vand.u32 %v210, 4294901760
      %2205 = vmatpush1.msra.mxu0 %v2204
      %2206 = vmatprep.subr.mxu0 0.0
      %v2207 = vand.u32 %v209, 4294901760
      %2208 = vmatpush1.msra.mxu0 %v2207
      %2209 = vmatprep.subr.mxu0 0.0
      %v2210 = vand.u32 %v208, 4294901760
      %2211 = vmatpush1.msra.mxu0 %v2210
      %2212 = vmatprep.subr.mxu0 0.0
      %v2213 = vand.u32 %v207, 4294901760
      %2214 = vmatpush1.msra.mxu0 %v2213
      %2215 = vmatprep.subr.mxu0 0.0
      %v2216 = vand.u32 %v206, 4294901760
      %2217 = vmatpush1.msra.mxu0 %v2216
      %2218 = vmatprep.subr.mxu0 0.0
      %v2219 = vand.u32 %v205, 4294901760
      %2220 = vmatpush1.msra.mxu0 %v2219
      %2221 = vmatprep.subr.mxu0 0.0
      %v2222 = vand.u32 %v204, 4294901760
      %2223 = vmatpush1.msra.mxu0 %v2222
      %2224 = vmatprep.subr.mxu0 0.0
      %2225 = vmatpush2.msra.mxu0 0.0
      %2226 = vmatprep.subr.mxu0 0.0
      %2227 = vmatpush2.msra.mxu0 0.0
      %2228 = vmatprep.subr.mxu0 0.0
      %2229 = vmatpush2.msra.mxu0 0.0
      %2230 = vmatprep.subr.mxu0 0.0
      %2231 = vmatpush2.msra.mxu0 0.0
      %2232 = vmatprep.subr.mxu0 0.0
      %2233 = vmatpush2.msra.mxu0 0.0
      %2234 = vmatprep.subr.mxu0 0.0
      %2235 = vmatpush2.msra.mxu0 0.0
      %2236 = vmatprep.subr.mxu0 0.0
      %2237 = vmatpush2.msra.mxu0 0.0
      %2238 = vmatprep.subr.mxu0 0.0
      %2239 = vmatpush2.msra.mxu0 0.0
      %2240 = vmatprep.subr.mxu0 0.0
      %2241 = vmatpush2.msra.mxu0 0.0
      %2242 = vmatprep.subr.mxu0 0.0
      %2243 = vmatpush2.msra.mxu0 0.0
      %2244 = vmatprep.subr.mxu0 0.0
      %2245 = vmatpush2.msra.mxu0 0.0
      %2246 = vmatprep.subr.mxu0 0.0
      %2247 = vmatpush2.msra.mxu0 0.0
      %2248 = vmatprep.subr.mxu0 0.0
      %2249 = vmatpush2.msra.mxu0 0.0
      %2250 = vmatprep.subr.mxu0 0.0
      %2251 = vmatpush2.msra.mxu0 0.0
      %2252 = vmatprep.subr.mxu0 0.0
      %2253 = vmatpush2.msra.mxu0 0.0
      %2254 = vmatprep.subr.mxu0 0.0
      %2255 = vmatpush2.msra.mxu0 0.0
      %2256 = vmatprep.mubr.f32.mxu0 0.0
      %v2257 = vand.u32 %v2175, 4294901760
      %v2258 = vsub.f32 %v2175, %v2257
      %v2259 = vand.u32 %v2258, 4294901760
      %v2260 = vsub.f32 %v2258, %v2259
      %v2261 = vand.u32 %v2260, 4294901760
      %2262 = vmatmul.mubr.f32.gmra.mxu0 %v2261
      %v2263 = vpop.f32.mrf.mxu0
      %v2264 = vadd.f32 0.0, %v2263
      %v2265 = vpop.f32.mrf.mxu0
      %2266 = vdwg.mxu0
      %2267 = vmatprep.subr.mxu0 0.0
      %v2268 = vand.u32 %v219, 4294901760
      %v2269 = vsub.f32 %v219, %v2268
      %v2270 = vand.u32 %v2269, 4294901760
      %v2271 = vsub.f32 %v2269, %v2270
      %v2272 = vand.u32 %v2271, 4294901760
      %2273 = vmatpush1.msra.mxu0 %v2272
      %2274 = vmatprep.subr.mxu0 0.0
      %v2275 = vand.u32 %v218, 4294901760
      %v2276 = vsub.f32 %v218, %v2275
      %v2277 = vand.u32 %v2276, 4294901760
      %v2278 = vsub.f32 %v2276, %v2277
      %v2279 = vand.u32 %v2278, 4294901760
      %2280 = vmatpush1.msra.mxu0 %v2279
      %2281 = vmatprep.subr.mxu0 0.0
      %v2282 = vand.u32 %v217, 4294901760
      %v2283 = vsub.f32 %v217, %v2282
      %v2284 = vand.u32 %v2283, 4294901760
      %v2285 = vsub.f32 %v2283, %v2284
      %v2286 = vand.u32 %v2285, 4294901760
      %2287 = vmatpush1.msra.mxu0 %v2286
      %2288 = vmatprep.subr.mxu0 0.0
      %v2289 = vand.u32 %v216, 4294901760
      %v2290 = vsub.f32 %v216, %v2289
      %v2291 = vand.u32 %v2290, 4294901760
      %v2292 = vsub.f32 %v2290, %v2291
      %v2293 = vand.u32 %v2292, 4294901760
      %2294 = vmatpush1.msra.mxu0 %v2293
      %2295 = vmatprep.subr.mxu0 0.0
      %v2296 = vand.u32 %v215, 4294901760
      %v2297 = vsub.f32 %v215, %v2296
      %v2298 = vand.u32 %v2297, 4294901760
      %v2299 = vsub.f32 %v2297, %v2298
      %v2300 = vand.u32 %v2299, 4294901760
      %2301 = vmatpush1.msra.mxu0 %v2300
      %2302 = vmatprep.subr.mxu0 0.0
      %v2303 = vand.u32 %v214, 4294901760
      %v2304 = vsub.f32 %v214, %v2303
      %v2305 = vand.u32 %v2304, 4294901760
      %v2306 = vsub.f32 %v2304, %v2305
      %v2307 = vand.u32 %v2306, 4294901760
      %2308 = vmatpush1.msra.mxu0 %v2307
      %2309 = vmatprep.subr.mxu0 0.0
      %v2310 = vand.u32 %v213, 4294901760
      %v2311 = vsub.f32 %v213, %v2310
      %v2312 = vand.u32 %v2311, 4294901760
      %v2313 = vsub.f32 %v2311, %v2312
      %v2314 = vand.u32 %v2313, 4294901760
      %2315 = vmatpush1.msra.mxu0 %v2314
      %2316 = vmatprep.subr.mxu0 0.0
      %v2317 = vand.u32 %v212, 4294901760
      %v2318 = vsub.f32 %v212, %v2317
      %v2319 = vand.u32 %v2318, 4294901760
      %v2320 = vsub.f32 %v2318, %v2319
      %v2321 = vand.u32 %v2320, 4294901760
      %2322 = vmatpush1.msra.mxu0 %v2321
      %2323 = vmatprep.subr.mxu0 0.0
      %v2324 = vand.u32 %v211, 4294901760
      %v2325 = vsub.f32 %v211, %v2324
      %v2326 = vand.u32 %v2325, 4294901760
      %v2327 = vsub.f32 %v2325, %v2326
      %v2328 = vand.u32 %v2327, 4294901760
      %2329 = vmatpush1.msra.mxu0 %v2328
      %2330 = vmatprep.subr.mxu0 0.0
      %v2331 = vand.u32 %v210, 4294901760
      %v2332 = vsub.f32 %v210, %v2331
      %v2333 = vand.u32 %v2332, 4294901760
      %v2334 = vsub.f32 %v2332, %v2333
      %v2335 = vand.u32 %v2334, 4294901760
      %2336 = vmatpush1.msra.mxu0 %v2335
      %2337 = vmatprep.subr.mxu0 0.0
      %v2338 = vand.u32 %v209, 4294901760
      %v2339 = vsub.f32 %v209, %v2338
      %v2340 = vand.u32 %v2339, 4294901760
      %v2341 = vsub.f32 %v2339, %v2340
      %v2342 = vand.u32 %v2341, 4294901760
      %2343 = vmatpush1.msra.mxu0 %v2342
      %2344 = vmatprep.subr.mxu0 0.0
      %v2345 = vand.u32 %v208, 4294901760
      %v2346 = vsub.f32 %v208, %v2345
      %v2347 = vand.u32 %v2346, 4294901760
      %v2348 = vsub.f32 %v2346, %v2347
      %v2349 = vand.u32 %v2348, 4294901760
      %2350 = vmatpush1.msra.mxu0 %v2349
      %2351 = vmatprep.subr.mxu0 0.0
      %v2352 = vand.u32 %v207, 4294901760
      %v2353 = vsub.f32 %v207, %v2352
      %v2354 = vand.u32 %v2353, 4294901760
      %v2355 = vsub.f32 %v2353, %v2354
      %v2356 = vand.u32 %v2355, 4294901760
      %2357 = vmatpush1.msra.mxu0 %v2356
      %2358 = vmatprep.subr.mxu0 0.0
      %v2359 = vand.u32 %v206, 4294901760
      %v2360 = vsub.f32 %v206, %v2359
      %v2361 = vand.u32 %v2360, 4294901760
      %v2362 = vsub.f32 %v2360, %v2361
      %v2363 = vand.u32 %v2362, 4294901760
      %2364 = vmatpush1.msra.mxu0 %v2363
      %2365 = vmatprep.subr.mxu0 0.0
      %v2366 = vand.u32 %v205, 4294901760
      %v2367 = vsub.f32 %v205, %v2366
      %v2368 = vand.u32 %v2367, 4294901760
      %v2369 = vsub.f32 %v2367, %v2368
      %v2370 = vand.u32 %v2369, 4294901760
      %2371 = vmatpush1.msra.mxu0 %v2370
      %2372 = vmatprep.subr.mxu0 0.0
      %v2373 = vand.u32 %v204, 4294901760
      %v2374 = vsub.f32 %v204, %v2373
      %v2375 = vand.u32 %v2374, 4294901760
      %v2376 = vsub.f32 %v2374, %v2375
      %v2377 = vand.u32 %v2376, 4294901760
      %2378 = vmatpush1.msra.mxu0 %v2377
      %2379 = vmatprep.subr.mxu0 0.0
      %2380 = vmatpush2.msra.mxu0 0.0
      %2381 = vmatprep.subr.mxu0 0.0
      %2382 = vmatpush2.msra.mxu0 0.0
      %2383 = vmatprep.subr.mxu0 0.0
      %2384 = vmatpush2.msra.mxu0 0.0
      %2385 = vmatprep.subr.mxu0 0.0
      %2386 = vmatpush2.msra.mxu0 0.0
      %2387 = vmatprep.subr.mxu0 0.0
      %2388 = vmatpush2.msra.mxu0 0.0
      %2389 = vmatprep.subr.mxu0 0.0
      %2390 = vmatpush2.msra.mxu0 0.0
      %2391 = vmatprep.subr.mxu0 0.0
      %2392 = vmatpush2.msra.mxu0 0.0
      %2393 = vmatprep.subr.mxu0 0.0
      %2394 = vmatpush2.msra.mxu0 0.0
      %2395 = vmatprep.subr.mxu0 0.0
      %2396 = vmatpush2.msra.mxu0 0.0
      %2397 = vmatprep.subr.mxu0 0.0
      %2398 = vmatpush2.msra.mxu0 0.0
      %2399 = vmatprep.subr.mxu0 0.0
      %2400 = vmatpush2.msra.mxu0 0.0
      %2401 = vmatprep.subr.mxu0 0.0
      %2402 = vmatpush2.msra.mxu0 0.0
      %2403 = vmatprep.subr.mxu0 0.0
      %2404 = vmatpush2.msra.mxu0 0.0
      %2405 = vmatprep.subr.mxu0 0.0
      %2406 = vmatpush2.msra.mxu0 0.0
      %2407 = vmatprep.subr.mxu0 0.0
      %2408 = vmatpush2.msra.mxu0 0.0
      %2409 = vmatprep.subr.mxu0 0.0
      %2410 = vmatpush2.msra.mxu0 0.0
      %2411 = vmatprep.mubr.f32.mxu0 0.0
      %v2412 = vand.u32 %v2175, 4294901760
      %2413 = vmatmul.mubr.f32.gmra.mxu0 %v2412
      %v2414 = vpop.f32.mrf.mxu0
      %v2415 = vadd.f32 %v2264, %v2414
      %v2416 = vpop.f32.mrf.mxu0
      %2417 = vdwg.mxu0
      %2418 = vmatprep.subr.mxu0 0.0
      %v2419 = vand.u32 %v219, 4294901760
      %v2420 = vsub.f32 %v219, %v2419
      %2421 = vmatpush1.msra.mxu0 %v2420
      %2422 = vmatprep.subr.mxu0 0.0
      %v2423 = vand.u32 %v218, 4294901760
      %v2424 = vsub.f32 %v218, %v2423
      %2425 = vmatpush1.msra.mxu0 %v2424
      %2426 = vmatprep.subr.mxu0 0.0
      %v2427 = vand.u32 %v217, 4294901760
      %v2428 = vsub.f32 %v217, %v2427
      %2429 = vmatpush1.msra.mxu0 %v2428
      %2430 = vmatprep.subr.mxu0 0.0
      %v2431 = vand.u32 %v216, 4294901760
      %v2432 = vsub.f32 %v216, %v2431
      %2433 = vmatpush1.msra.mxu0 %v2432
      %2434 = vmatprep.subr.mxu0 0.0
      %v2435 = vand.u32 %v215, 4294901760
      %v2436 = vsub.f32 %v215, %v2435
      %2437 = vmatpush1.msra.mxu0 %v2436
      %2438 = vmatprep.subr.mxu0 0.0
      %v2439 = vand.u32 %v214, 4294901760
      %v2440 = vsub.f32 %v214, %v2439
      %2441 = vmatpush1.msra.mxu0 %v2440
      %2442 = vmatprep.subr.mxu0 0.0
      %v2443 = vand.u32 %v213, 4294901760
      %v2444 = vsub.f32 %v213, %v2443
      %2445 = vmatpush1.msra.mxu0 %v2444
      %2446 = vmatprep.subr.mxu0 0.0
      %v2447 = vand.u32 %v212, 4294901760
      %v2448 = vsub.f32 %v212, %v2447
      %2449 = vmatpush1.msra.mxu0 %v2448
      %2450 = vmatprep.subr.mxu0 0.0
      %v2451 = vand.u32 %v211, 4294901760
      %v2452 = vsub.f32 %v211, %v2451
      %2453 = vmatpush1.msra.mxu0 %v2452
      %2454 = vmatprep.subr.mxu0 0.0
      %v2455 = vand.u32 %v210, 4294901760
      %v2456 = vsub.f32 %v210, %v2455
      %2457 = vmatpush1.msra.mxu0 %v2456
      %2458 = vmatprep.subr.mxu0 0.0
      %v2459 = vand.u32 %v209, 4294901760
      %v2460 = vsub.f32 %v209, %v2459
      %2461 = vmatpush1.msra.mxu0 %v2460
      %2462 = vmatprep.subr.mxu0 0.0
      %v2463 = vand.u32 %v208, 4294901760
      %v2464 = vsub.f32 %v208, %v2463
      %2465 = vmatpush1.msra.mxu0 %v2464
      %2466 = vmatprep.subr.mxu0 0.0
      %v2467 = vand.u32 %v207, 4294901760
      %v2468 = vsub.f32 %v207, %v2467
      %2469 = vmatpush1.msra.mxu0 %v2468
      %2470 = vmatprep.subr.mxu0 0.0
      %v2471 = vand.u32 %v206, 4294901760
      %v2472 = vsub.f32 %v206, %v2471
      %2473 = vmatpush1.msra.mxu0 %v2472
      %2474 = vmatprep.subr.mxu0 0.0
      %v2475 = vand.u32 %v205, 4294901760
      %v2476 = vsub.f32 %v205, %v2475
      %2477 = vmatpush1.msra.mxu0 %v2476
      %2478 = vmatprep.subr.mxu0 0.0
      %v2479 = vand.u32 %v204, 4294901760
      %v2480 = vsub.f32 %v204, %v2479
      %2481 = vmatpush1.msra.mxu0 %v2480
      %2482 = vmatprep.subr.mxu0 0.0
      %2483 = vmatpush2.msra.mxu0 0.0
      %2484 = vmatprep.subr.mxu0 0.0
      %2485 = vmatpush2.msra.mxu0 0.0
      %2486 = vmatprep.subr.mxu0 0.0
      %2487 = vmatpush2.msra.mxu0 0.0
      %2488 = vmatprep.subr.mxu0 0.0
      %2489 = vmatpush2.msra.mxu0 0.0
      %2490 = vmatprep.subr.mxu0 0.0
      %2491 = vmatpush2.msra.mxu0 0.0
      %2492 = vmatprep.subr.mxu0 0.0
      %2493 = vmatpush2.msra.mxu0 0.0
      %2494 = vmatprep.subr.mxu0 0.0
      %2495 = vmatpush2.msra.mxu0 0.0
      %2496 = vmatprep.subr.mxu0 0.0
      %2497 = vmatpush2.msra.mxu0 0.0
      %2498 = vmatprep.subr.mxu0 0.0
      %2499 = vmatpush2.msra.mxu0 0.0
      %2500 = vmatprep.subr.mxu0 0.0
      %2501 = vmatpush2.msra.mxu0 0.0
      %2502 = vmatprep.subr.mxu0 0.0
      %2503 = vmatpush2.msra.mxu0 0.0
      %2504 = vmatprep.subr.mxu0 0.0
      %2505 = vmatpush2.msra.mxu0 0.0
      %2506 = vmatprep.subr.mxu0 0.0
      %2507 = vmatpush2.msra.mxu0 0.0
      %2508 = vmatprep.subr.mxu0 0.0
      %2509 = vmatpush2.msra.mxu0 0.0
      %2510 = vmatprep.subr.mxu0 0.0
      %2511 = vmatpush2.msra.mxu0 0.0
      %2512 = vmatprep.subr.mxu0 0.0
      %2513 = vmatpush2.msra.mxu0 0.0
      %2514 = vmatprep.mubr.f32.mxu0 0.0
      %v2515 = vand.u32 %v2175, 4294901760
      %v2516 = vsub.f32 %v2175, %v2515
      %2517 = vmatmul.mubr.f32.gmra.mxu0 %v2516
      %v2518 = vpop.f32.mrf.mxu0
      %v2519 = vadd.f32 %v2415, %v2518
      %v2520 = vpop.f32.mrf.mxu0
      %2521 = vdwg.mxu0
      %2522 = vmatprep.subr.mxu0 0.0
      %v2523 = vand.u32 %v219, 4294901760
      %2524 = vmatpush1.msra.mxu0 %v2523
      %2525 = vmatprep.subr.mxu0 0.0
      %v2526 = vand.u32 %v218, 4294901760
      %2527 = vmatpush1.msra.mxu0 %v2526
      %2528 = vmatprep.subr.mxu0 0.0
      %v2529 = vand.u32 %v217, 4294901760
      %2530 = vmatpush1.msra.mxu0 %v2529
      %2531 = vmatprep.subr.mxu0 0.0
      %v2532 = vand.u32 %v216, 4294901760
      %2533 = vmatpush1.msra.mxu0 %v2532
      %2534 = vmatprep.subr.mxu0 0.0
      %v2535 = vand.u32 %v215, 4294901760
      %2536 = vmatpush1.msra.mxu0 %v2535
      %2537 = vmatprep.subr.mxu0 0.0
      %v2538 = vand.u32 %v214, 4294901760
      %2539 = vmatpush1.msra.mxu0 %v2538
      %2540 = vmatprep.subr.mxu0 0.0
      %v2541 = vand.u32 %v213, 4294901760
      %2542 = vmatpush1.msra.mxu0 %v2541
      %2543 = vmatprep.subr.mxu0 0.0
      %v2544 = vand.u32 %v212, 4294901760
      %2545 = vmatpush1.msra.mxu0 %v2544
      %2546 = vmatprep.subr.mxu0 0.0
      %v2547 = vand.u32 %v211, 4294901760
      %2548 = vmatpush1.msra.mxu0 %v2547
      %2549 = vmatprep.subr.mxu0 0.0
      %v2550 = vand.u32 %v210, 4294901760
      %2551 = vmatpush1.msra.mxu0 %v2550
      %2552 = vmatprep.subr.mxu0 0.0
      %v2553 = vand.u32 %v209, 4294901760
      %2554 = vmatpush1.msra.mxu0 %v2553
      %2555 = vmatprep.subr.mxu0 0.0
      %v2556 = vand.u32 %v208, 4294901760
      %2557 = vmatpush1.msra.mxu0 %v2556
      %2558 = vmatprep.subr.mxu0 0.0
      %v2559 = vand.u32 %v207, 4294901760
      %2560 = vmatpush1.msra.mxu0 %v2559
      %2561 = vmatprep.subr.mxu0 0.0
      %v2562 = vand.u32 %v206, 4294901760
      %2563 = vmatpush1.msra.mxu0 %v2562
      %2564 = vmatprep.subr.mxu0 0.0
      %v2565 = vand.u32 %v205, 4294901760
      %2566 = vmatpush1.msra.mxu0 %v2565
      %2567 = vmatprep.subr.mxu0 0.0
      %v2568 = vand.u32 %v204, 4294901760
      %2569 = vmatpush1.msra.mxu0 %v2568
      %2570 = vmatprep.subr.mxu0 0.0
      %2571 = vmatpush2.msra.mxu0 0.0
      %2572 = vmatprep.subr.mxu0 0.0
      %2573 = vmatpush2.msra.mxu0 0.0
      %2574 = vmatprep.subr.mxu0 0.0
      %2575 = vmatpush2.msra.mxu0 0.0
      %2576 = vmatprep.subr.mxu0 0.0
      %2577 = vmatpush2.msra.mxu0 0.0
      %2578 = vmatprep.subr.mxu0 0.0
      %2579 = vmatpush2.msra.mxu0 0.0
      %2580 = vmatprep.subr.mxu0 0.0
      %2581 = vmatpush2.msra.mxu0 0.0
      %2582 = vmatprep.subr.mxu0 0.0
      %2583 = vmatpush2.msra.mxu0 0.0
      %2584 = vmatprep.subr.mxu0 0.0
      %2585 = vmatpush2.msra.mxu0 0.0
      %2586 = vmatprep.subr.mxu0 0.0
      %2587 = vmatpush2.msra.mxu0 0.0
      %2588 = vmatprep.subr.mxu0 0.0
      %2589 = vmatpush2.msra.mxu0 0.0
      %2590 = vmatprep.subr.mxu0 0.0
      %2591 = vmatpush2.msra.mxu0 0.0
      %2592 = vmatprep.subr.mxu0 0.0
      %2593 = vmatpush2.msra.mxu0 0.0
      %2594 = vmatprep.subr.mxu0 0.0
      %2595 = vmatpush2.msra.mxu0 0.0
      %2596 = vmatprep.subr.mxu0 0.0
      %2597 = vmatpush2.msra.mxu0 0.0
      %2598 = vmatprep.subr.mxu0 0.0
      %2599 = vmatpush2.msra.mxu0 0.0
      %2600 = vmatprep.subr.mxu0 0.0
      %2601 = vmatpush2.msra.mxu0 0.0
      %2602 = vmatprep.mubr.f32.mxu0 0.0
      %v2603 = vand.u32 %v2175, 4294901760
      %v2604 = vsub.f32 %v2175, %v2603
      %v2605 = vand.u32 %v2604, 4294901760
      %2606 = vmatmul.mubr.f32.gmra.mxu0 %v2605
      %v2607 = vpop.f32.mrf.mxu0
      %v2608 = vadd.f32 %v2519, %v2607
      %v2609 = vpop.f32.mrf.mxu0
      %2610 = vdwg.mxu0
      %2611 = vmatprep.subr.mxu0 0.0
      %v2612 = vand.u32 %v219, 4294901760
      %v2613 = vsub.f32 %v219, %v2612
      %v2614 = vand.u32 %v2613, 4294901760
      %2615 = vmatpush1.msra.mxu0 %v2614
      %2616 = vmatprep.subr.mxu0 0.0
      %v2617 = vand.u32 %v218, 4294901760
      %v2618 = vsub.f32 %v218, %v2617
      %v2619 = vand.u32 %v2618, 4294901760
      %2620 = vmatpush1.msra.mxu0 %v2619
      %2621 = vmatprep.subr.mxu0 0.0
      %v2622 = vand.u32 %v217, 4294901760
      %v2623 = vsub.f32 %v217, %v2622
      %v2624 = vand.u32 %v2623, 4294901760
      %2625 = vmatpush1.msra.mxu0 %v2624
      %2626 = vmatprep.subr.mxu0 0.0
      %v2627 = vand.u32 %v216, 4294901760
      %v2628 = vsub.f32 %v216, %v2627
      %v2629 = vand.u32 %v2628, 4294901760
      %2630 = vmatpush1.msra.mxu0 %v2629
      %2631 = vmatprep.subr.mxu0 0.0
      %v2632 = vand.u32 %v215, 4294901760
      %v2633 = vsub.f32 %v215, %v2632
      %v2634 = vand.u32 %v2633, 4294901760
      %2635 = vmatpush1.msra.mxu0 %v2634
      %2636 = vmatprep.subr.mxu0 0.0
      %v2637 = vand.u32 %v214, 4294901760
      %v2638 = vsub.f32 %v214, %v2637
      %v2639 = vand.u32 %v2638, 4294901760
      %2640 = vmatpush1.msra.mxu0 %v2639
      %2641 = vmatprep.subr.mxu0 0.0
      %v2642 = vand.u32 %v213, 4294901760
      %v2643 = vsub.f32 %v213, %v2642
      %v2644 = vand.u32 %v2643, 4294901760
      %2645 = vmatpush1.msra.mxu0 %v2644
      %2646 = vmatprep.subr.mxu0 0.0
      %v2647 = vand.u32 %v212, 4294901760
      %v2648 = vsub.f32 %v212, %v2647
      %v2649 = vand.u32 %v2648, 4294901760
      %2650 = vmatpush1.msra.mxu0 %v2649
      %2651 = vmatprep.subr.mxu0 0.0
      %v2652 = vand.u32 %v211, 4294901760
      %v2653 = vsub.f32 %v211, %v2652
      %v2654 = vand.u32 %v2653, 4294901760
      %2655 = vmatpush1.msra.mxu0 %v2654
      %2656 = vmatprep.subr.mxu0 0.0
      %v2657 = vand.u32 %v210, 4294901760
      %v2658 = vsub.f32 %v210, %v2657
      %v2659 = vand.u32 %v2658, 4294901760
      %2660 = vmatpush1.msra.mxu0 %v2659
      %2661 = vmatprep.subr.mxu0 0.0
      %v2662 = vand.u32 %v209, 4294901760
      %v2663 = vsub.f32 %v209, %v2662
      %v2664 = vand.u32 %v2663, 4294901760
      %2665 = vmatpush1.msra.mxu0 %v2664
      %2666 = vmatprep.subr.mxu0 0.0
      %v2667 = vand.u32 %v208, 4294901760
      %v2668 = vsub.f32 %v208, %v2667
      %v2669 = vand.u32 %v2668, 4294901760
      %2670 = vmatpush1.msra.mxu0 %v2669
      %2671 = vmatprep.subr.mxu0 0.0
      %v2672 = vand.u32 %v207, 4294901760
      %v2673 = vsub.f32 %v207, %v2672
      %v2674 = vand.u32 %v2673, 4294901760
      %2675 = vmatpush1.msra.mxu0 %v2674
      %2676 = vmatprep.subr.mxu0 0.0
      %v2677 = vand.u32 %v206, 4294901760
      %v2678 = vsub.f32 %v206, %v2677
      %v2679 = vand.u32 %v2678, 4294901760
      %2680 = vmatpush1.msra.mxu0 %v2679
      %2681 = vmatprep.subr.mxu0 0.0
      %v2682 = vand.u32 %v205, 4294901760
      %v2683 = vsub.f32 %v205, %v2682
      %v2684 = vand.u32 %v2683, 4294901760
      %2685 = vmatpush1.msra.mxu0 %v2684
      %2686 = vmatprep.subr.mxu0 0.0
      %v2687 = vand.u32 %v204, 4294901760
      %v2688 = vsub.f32 %v204, %v2687
      %v2689 = vand.u32 %v2688, 4294901760
      %2690 = vmatpush1.msra.mxu0 %v2689
      %2691 = vmatprep.subr.mxu0 0.0
      %2692 = vmatpush2.msra.mxu0 0.0
      %2693 = vmatprep.subr.mxu0 0.0
      %2694 = vmatpush2.msra.mxu0 0.0
      %2695 = vmatprep.subr.mxu0 0.0
      %2696 = vmatpush2.msra.mxu0 0.0
      %2697 = vmatprep.subr.mxu0 0.0
      %2698 = vmatpush2.msra.mxu0 0.0
      %2699 = vmatprep.subr.mxu0 0.0
      %2700 = vmatpush2.msra.mxu0 0.0
      %2701 = vmatprep.subr.mxu0 0.0
      %2702 = vmatpush2.msra.mxu0 0.0
      %2703 = vmatprep.subr.mxu0 0.0
      %2704 = vmatpush2.msra.mxu0 0.0
      %2705 = vmatprep.subr.mxu0 0.0
      %2706 = vmatpush2.msra.mxu0 0.0
      %2707 = vmatprep.subr.mxu0 0.0
      %2708 = vmatpush2.msra.mxu0 0.0
      %2709 = vmatprep.subr.mxu0 0.0
      %2710 = vmatpush2.msra.mxu0 0.0
      %2711 = vmatprep.subr.mxu0 0.0
      %2712 = vmatpush2.msra.mxu0 0.0
      %2713 = vmatprep.subr.mxu0 0.0
      %2714 = vmatpush2.msra.mxu0 0.0
      %2715 = vmatprep.subr.mxu0 0.0
      %2716 = vmatpush2.msra.mxu0 0.0
      %2717 = vmatprep.subr.mxu0 0.0
      %2718 = vmatpush2.msra.mxu0 0.0
      %2719 = vmatprep.subr.mxu0 0.0
      %2720 = vmatpush2.msra.mxu0 0.0
      %2721 = vmatprep.subr.mxu0 0.0
      %2722 = vmatpush2.msra.mxu0 0.0
      %2723 = vmatprep.mubr.f32.mxu0 0.0
      %v2724 = vand.u32 %v2175, 4294901760
      %2725 = vmatmul.mubr.f32.gmra.mxu0 %v2724
      %v2726 = vpop.f32.mrf.mxu0
      %v2727 = vadd.f32 %v2608, %v2726
      %v2728 = vpop.f32.mrf.mxu0
      %2729 = vdwg.mxu0
      %2730 = vmatprep.subr.mxu0 0.0
      %v2731 = vand.u32 %v219, 4294901760
      %2732 = vmatpush1.msra.mxu0 %v2731
      %2733 = vmatprep.subr.mxu0 0.0
      %v2734 = vand.u32 %v218, 4294901760
      %2735 = vmatpush1.msra.mxu0 %v2734
      %2736 = vmatprep.subr.mxu0 0.0
      %v2737 = vand.u32 %v217, 4294901760
      %2738 = vmatpush1.msra.mxu0 %v2737
      %2739 = vmatprep.subr.mxu0 0.0
      %v2740 = vand.u32 %v216, 4294901760
      %2741 = vmatpush1.msra.mxu0 %v2740
      %2742 = vmatprep.subr.mxu0 0.0
      %v2743 = vand.u32 %v215, 4294901760
      %2744 = vmatpush1.msra.mxu0 %v2743
      %2745 = vmatprep.subr.mxu0 0.0
      %v2746 = vand.u32 %v214, 4294901760
      %2747 = vmatpush1.msra.mxu0 %v2746
      %2748 = vmatprep.subr.mxu0 0.0
      %v2749 = vand.u32 %v213, 4294901760
      %2750 = vmatpush1.msra.mxu0 %v2749
      %2751 = vmatprep.subr.mxu0 0.0
      %v2752 = vand.u32 %v212, 4294901760
      %2753 = vmatpush1.msra.mxu0 %v2752
      %2754 = vmatprep.subr.mxu0 0.0
      %v2755 = vand.u32 %v211, 4294901760
      %2756 = vmatpush1.msra.mxu0 %v2755
      %2757 = vmatprep.subr.mxu0 0.0
      %v2758 = vand.u32 %v210, 4294901760
      %2759 = vmatpush1.msra.mxu0 %v2758
      %2760 = vmatprep.subr.mxu0 0.0
      %v2761 = vand.u32 %v209, 4294901760
      %2762 = vmatpush1.msra.mxu0 %v2761
      %2763 = vmatprep.subr.mxu0 0.0
      %v2764 = vand.u32 %v208, 4294901760
      %2765 = vmatpush1.msra.mxu0 %v2764
      %2766 = vmatprep.subr.mxu0 0.0
      %v2767 = vand.u32 %v207, 4294901760
      %2768 = vmatpush1.msra.mxu0 %v2767
      %2769 = vmatprep.subr.mxu0 0.0
      %v2770 = vand.u32 %v206, 4294901760
      %2771 = vmatpush1.msra.mxu0 %v2770
      %2772 = vmatprep.subr.mxu0 0.0
      %v2773 = vand.u32 %v205, 4294901760
      %2774 = vmatpush1.msra.mxu0 %v2773
      %2775 = vmatprep.subr.mxu0 0.0
      %v2776 = vand.u32 %v204, 4294901760
      %2777 = vmatpush1.msra.mxu0 %v2776
      %2778 = vmatprep.subr.mxu0 0.0
      %2779 = vmatpush2.msra.mxu0 0.0
      %2780 = vmatprep.subr.mxu0 0.0
      %2781 = vmatpush2.msra.mxu0 0.0
      %2782 = vmatprep.subr.mxu0 0.0
      %2783 = vmatpush2.msra.mxu0 0.0
      %2784 = vmatprep.subr.mxu0 0.0
      %2785 = vmatpush2.msra.mxu0 0.0
      %2786 = vmatprep.subr.mxu0 0.0
      %2787 = vmatpush2.msra.mxu0 0.0
      %2788 = vmatprep.subr.mxu0 0.0
      %2789 = vmatpush2.msra.mxu0 0.0
      %2790 = vmatprep.subr.mxu0 0.0
      %2791 = vmatpush2.msra.mxu0 0.0
      %2792 = vmatprep.subr.mxu0 0.0
      %2793 = vmatpush2.msra.mxu0 0.0
      %2794 = vmatprep.subr.mxu0 0.0
      %2795 = vmatpush2.msra.mxu0 0.0
      %2796 = vmatprep.subr.mxu0 0.0
      %2797 = vmatpush2.msra.mxu0 0.0
      %2798 = vmatprep.subr.mxu0 0.0
      %2799 = vmatpush2.msra.mxu0 0.0
      %2800 = vmatprep.subr.mxu0 0.0
      %2801 = vmatpush2.msra.mxu0 0.0
      %2802 = vmatprep.subr.mxu0 0.0
      %2803 = vmatpush2.msra.mxu0 0.0
      %2804 = vmatprep.subr.mxu0 0.0
      %2805 = vmatpush2.msra.mxu0 0.0
      %2806 = vmatprep.subr.mxu0 0.0
      %2807 = vmatpush2.msra.mxu0 0.0
      %2808 = vmatprep.subr.mxu0 0.0
      %2809 = vmatpush2.msra.mxu0 0.0
      %2810 = vmatprep.mubr.f32.mxu0 0.0
      %v2811 = vand.u32 %v2175, 4294901760
      %2812 = vmatmul.mubr.f32.gmra.mxu0 %v2811
      %v2813 = vpop.f32.mrf.mxu0
      %v2814 = vadd.f32 %v2727, %v2813
      %v2815 = vpop.f32.mrf.mxu0
      %2816 = vdwg.mxu0
      %v2817 = vmul.f32 %v2172, %v2172
      %v2818 = vsub.f32 %v2814, %v2817
      %v2819 = vmax.f32 %v2818, 0.0
      %v2820 = vrsqrt.pop %v2819
      %v2821 = vmul.f32 %v2819, %v2820
      %vm2822 = vcmp.eq.f32.partialorder %v2819, inf
      %v2823 = vsel %vm2822, %v2819, %v2821
      %vm2824 = vcmp.eq.f32.partialorder %v2819, 0.0
      %v2825 = vand.u32 %v2819, 2147483648
      %v2826 = vsel %vm2824, %v2825, %v2823
      %v2827 = vadd.f32 %v2826, 1e-07
      %v2828 = vrcp.pop %v2827
      %v2829 = vmul.f32 %v2827, %v2828
      %v2830 = vsub.f32 2.0, %v2829
      %v2831 = vmul.f32 %v2828, %v2830
      %v2832 = vsub.f32 %v1533, %v2172
      %v2833 = vmul.f32 %v2832, %v2831
      %v2834 = vlaneseq
      %v2835 = vshrl.u32 %v2834, 7
      %v2836 = vsub.s32 1, %v2835
      %v2837 = vrot.slane %v202, %v2836
      %v2838 = vmul.f32 %v2833, %v2837
      %v2839 = vlaneseq
      %v2840 = vshrl.u32 %v2839, 7
      %v2841 = vsub.s32 1, %v2840
      %v2842 = vrot.slane %v203, %v2841
      %v2843 = vadd.f32 %v2838, %v2842
      %s2844 = scalar_lea.vmem %s201, 2
      %2845 = vst [vmem:[%s2844] sm:$0x3] %v2843
      %p2846 = scmp.lt.s32.totalorder %s18, 1
      %s2847 = scalar_select %p2846, %s18, 1
      %p2848 = scmp.lt.s32.totalorder %s19, 0
      %s2849 = scalar_select %p2848, %s19, 0
      %s2850 = smul.addr %s2847, 2
      %s2851 = sadd.s32 %s2849, %s2850
      %s2852 = smul.addr %s2851, 2
      %s2853 = scalar_lea.vmem %s3, %s2852
      // Predicated region
      $region33: #{multihead_layer_norm.1} parent=31 // pred_check
        %p2854 = pneg %p116
      $region34: #{multihead_layer_norm.1} parent=31 // pred_check_branch
        %2856 = sbr.rel (%p2854) target = $region36
      $region35: #{multihead_layer_norm.1} parent=31 // pred_region
        _
      $region36: #{multihead_layer_norm.1} parent=31 // pred_fallthru
        _
    $region32: #{multihead_layer_norm.1} parent=5 // pred_fallthru
      _
    %p2857 = scmp.le.s32.totalorder 2, %s9
    // Predicated region
    $region37: #{multihead_layer_norm.1} parent=5 // pred_check
      %p2858 = pneg %p2857
    $region38: #{multihead_layer_norm.1} parent=5 // pred_check_branch
      %2860 = sbr.rel (%p2858) target = $region40
    $region39: #{multihead_layer_norm.1} parent=5 // pred_region
      %s2861 = ssub.s32 %s9, 2
      // Predicated region
      $region41: #{multihead_layer_norm.1} parent=39 // pred_check
        %p2862 = pneg %p122
      $region42: #{multihead_layer_norm.1} parent=39 // pred_check_branch
        %2864 = sbr.rel (%p2862) target = $region44
      $region43: #{multihead_layer_norm.1} parent=39 // pred_region
        %p2865 = scmp.lt.s32.totalorder %s20, 1
        %s2866 = scalar_select %p2865, %s20, 1
        %p2867 = scmp.lt.s32.totalorder %s21, 0
        %s2868 = scalar_select %p2867, %s21, 0
        %s2869 = smul.addr %s2866, 2
        %s2870 = sadd.s32 %s2868, %s2869
        %s2871 = smul.addr %s2870, 2
        %s2872 = scalar_lea.vmem %s3, %s2871
      $region44: #{multihead_layer_norm.1} parent=39 // pred_fallthru
        _
    $region40: #{multihead_layer_norm.1} parent=5 // pred_fallthru
      _
  $region6: #{multihead_layer_norm.1} parent=0 // loop_footer
    %s13 = sadd.s32 1, %s9
  $region7: #{multihead_layer_norm.1} parent=0 // loop_footer_branch
    %8 = sbr.rel target = $region3
  $region8: #{multihead_layer_norm.1} parent=0 // loop_exit
    _

</llo_original>
